<compile_context>
chip_gen: v6e
topology: v6e:2x2x1
jax: 0.10.0
libtpu: 0.0.40
codegen_flags: <defaults>
</compile_context>

<pallas_src>
import jax
import jax.numpy as jnp
import numpy as np
from jax.experimental import pallas as pl
from jax.experimental.pallas import tpu as pltpu

_EPS = 1e-5


def _gelu_exact(x):
    # PyTorch nn.GELU default (approximate='none'): 0.5*x*(1+erf(x/sqrt(2)))
    return 0.5 * x * (1.0 + jax.lax.erf(x * 0.7071067811865476))


def _doubleconv_kernel(x_ref, w1_ref, s1_ref, b1_ref, w2_ref, s2_ref, b2_ref,
                       out_ref, p1_ref, p2_ref):
    """One image per grid step.

    x_ref   : (1, Hp, Wp, Cin) f32   max-pooled input (NHWC, unpadded)
    w1_ref  : (9*Cin, Cmid)    bf16  im2col-folded conv1 weight
    w2_ref  : (9*Cmid, Cout)   bf16  im2col-folded conv2 weight
    s*/b*   : (1, C)           f32   folded BatchNorm scale / bias
    out_ref : (1, Cout, Hp*Wp) f32   channel-major (NCHW-native) output
    p1_ref  : (Hp, Wp, 9*Cin)  f32   conv1 im2col patch buffer (scratch)
    p2_ref  : (Hp, Wp, 9*Cmid) f32   conv2 im2col patch buffer (scratch)
    """
    Hp, Wp, _ = p1_ref.shape
    Cin = x_ref.shape[3]
    Cmid = w1_ref.shape[1]

    def scatter_taps(dst_ref, get_src, C):
        """K-folded im2col scatter with border clipping.

        For tap t the valid (in-bounds) shifted window is written from `get_src`; the single
        unwritten border row / column of that tap block is explicitly zeroed *every step*
        (scratch is uninitialised per-core under megacore batch sharding, so a one-time init
        would be unsafe).  Strips + rectangle exactly tile the (Hp, Wp) plane per tap.
        """
        for t in range(9):
            oy, ox = t // 3 - 1, t % 3 - 1
            blk = slice(t * C, (t + 1) * C)
            if oy != 0:                                   # missing 1-row border strip
                r = 0 if oy < 0 else Hp - 1
                dst_ref[r:r + 1, :, blk] = jnp.zeros((1, Wp, C), dst_ref.dtype)
            if ox != 0:                                   # missing 1-col border strip
                c = 0 if ox < 0 else Wp - 1
                dst_ref[:, c:c + 1, blk] = jnp.zeros((Hp, 1, C), dst_ref.dtype)
            h_lo, h_hi = max(0, -oy), Hp - max(0, oy)
            w_lo, w_hi = max(0, -ox), Wp - max(0, ox)
            dst_ref[h_lo:h_hi, w_lo:w_hi, blk] = get_src(h_lo + oy, h_hi + oy,
                                                         w_lo + ox, w_hi + ox)

    # ---- conv1: in-kernel halo via border-clipped scatter straight from ref views ------------
    scatter_taps(p1_ref, lambda y0, y1, x0, x1: x_ref[0, y0:y1, x0:x1, :], Cin)
    # Wp == f32 sublane tile (8) -> this flattening view is layout-free (no relayout copy).
    p1 = p1_ref[...].reshape(Hp * Wp, 9 * Cin)
    h1 = jnp.dot(p1.astype(jnp.bfloat16), w1_ref[...],      # bf16 MXU operands,
                 preferred_element_type=jnp.float32)         # f32 accumulation
    h1 = _gelu_exact(h1 * s1_ref[...] + b1_ref[...])         # folded BN1 + exact GELU
    h1_3d = h1.reshape(Hp, Wp, Cmid)

    # ---- conv2: scatter h1 straight from registers into the K-folded patch buffer ------------
    scatter_taps(p2_ref, lambda y0, y1, x0, x1: h1_3d[y0:y1, x0:x1, :], Cmid)
    p2 = p2_ref[...].reshape(Hp * Wp, 9 * Cmid)
    h2 = jnp.dot(p2.astype(jnp.bfloat16), w2_ref[...],
                 preferred_element_type=jnp.float32)          # (Hp*Wp, Cout) f32
    h2 = _gelu_exact(h2 * s2_ref[...] + b2_ref[...])          # folded BN2 + exact GELU

    # ---- channel-major store: tiny on-chip transpose -> 64-lane-dense rows, NCHW-native ------
    out_ref[0] = jnp.transpose(h2)                            # (Cout, Hp*Wp)


def down_pallas(x_nchw, kparams):
    """Down.forward: MaxPool2d(2) -> Conv3x3->BN->GELU -> Conv3x3->BN->GELU (eval-mode BN)."""
    w1f, s1, b1, w2f, s2, b2 = kparams
    N, Cin, H, W = x_nchw.shape
    Cmid = w1f.shape[1]
    Cout = w2f.shape[1]
    Hp, Wp = H // 2, W // 2
    HW = Hp * Wp

    # XLA glue (single fused pass): NCHW->NHWC + 2x2 max-pool.  No zero-pad copy: the conv halo
    # is handled in-kernel, so the activation takes exactly one HBM round trip into the kernel.
    x = jnp.transpose(x_nchw, (0, 2, 3, 1)).astype(jnp.float32)
    xpool = x.reshape(N, Hp, 2, Wp, 2, Cin).max(axis=(2, 4))          # (N, Hp, Wp, Cin)

    out = pl.pallas_call(
        _doubleconv_kernel,
        out_shape=jax.ShapeDtypeStruct((N, Cout, HW), jnp.float32),
        grid_spec=pltpu.PrefetchScalarGridSpec(
            num_scalar_prefetch=0,
            grid=(N,),                                    # one image per grid step
            in_specs=[
                pl.BlockSpec((1, Hp, Wp, Cin), lambda n: (n, 0, 0, 0)),
                pl.BlockSpec((9 * Cin, Cmid), lambda n: (0, 0)),
                pl.BlockSpec((1, Cmid), lambda n: (0, 0)),
                pl.BlockSpec((1, Cmid), lambda n: (0, 0)),
                pl.BlockSpec((9 * Cmid, Cout), lambda n: (0, 0)),
                pl.BlockSpec((1, Cout), lambda n: (0, 0)),
                pl.BlockSpec((1, Cout), lambda n: (0, 0)),
            ],
            out_specs=pl.BlockSpec((1, Cout, HW), lambda n: (n, 0, 0)),
            scratch_shapes=[
                pltpu.VMEM((Hp, Wp, 9 * Cin), jnp.float32),     # conv1 im2col patches
                pltpu.VMEM((Hp, Wp, 9 * Cmid), jnp.float32),    # conv2 im2col patches
            ],
        ),
        compiler_params=pltpu.CompilerParams(
            dimension_semantics=("parallel",),            # batch shards across TCs (v7x megacore)
            vmem_limit_bytes=32 * 1024 * 1024,
        ),
    )(xpool, w1f, s1, b1, w2f, s2, b2)

    # (N, Cout, Hp*Wp) and (N, Cout, Hp, Wp) share the same HBM layout: this reshape is free,
    # and the output is already NCHW (no transpose pass).
    return out.reshape(N, Cout, Hp, Wp)


def make_params(key, c_in, c_out, c_mid=None, eps=_EPS):
    """Deterministic synthetic parameters in PyTorch-style raw form (OIHW conv weights + BN
    gamma/beta/running-mean/var) and in kernel-friendly folded / im2col form."""
    if c_mid is None:
        c_mid = c_out
    ks = jax.random.split(key, 10)
    w1_oihw = 0.2 * jax.random.normal(ks[0], (c_mid, c_in, 3, 3), jnp.float32)
    w2_oihw = 0.2 * jax.random.normal(ks[1], (c_out, c_mid, 3, 3), jnp.float32)

    def make_bn(kg, kb, km, kv, c):
        gamma = 1.0 + 0.1 * jax.random.normal(kg, (c,), jnp.float32)
        beta = 0.1 * jax.random.normal(kb, (c,), jnp.float32)
        mean = 0.1 * jax.random.normal(km, (c,), jnp.float32)
        var = 0.5 + jax.random.uniform(kv, (c,), jnp.float32)
        scale = gamma / jnp.sqrt(var + eps)
        bias = beta - mean * scale
        return (gamma, beta, mean, var), scale, bias

    bn1_raw, s1, b1 = make_bn(ks[2], ks[3], ks[4], ks[5], c_mid)
    bn2_raw, s2, b2 = make_bn(ks[6], ks[7], ks[8], ks[9], c_out)

    # Kernel layout: im2col-folded (9*Cin, Cout) weights in bf16 (MXU operands, f32 accumulate);
    # BatchNorm folded to f32 per-channel scale/bias shaped (1, C) for lane broadcasting.
    w1f = jnp.transpose(w1_oihw, (2, 3, 1, 0)).reshape(9 * c_in, c_mid).astype(jnp.bfloat16)
    w2f = jnp.transpose(w2_oihw, (2, 3, 1, 0)).reshape(9 * c_mid, c_out).astype(jnp.bfloat16)
    kparams = (w1f, s1[None, :], b1[None, :], w2f, s2[None, :], b2[None, :])
    raw = dict(w1=w1_oihw, w2=w2_oihw, bn1=bn1_raw, bn2=bn2_raw)
    return kparams, raw


def ref_forward(x_nchw, raw, conv_operand_dtype=jnp.float32, eps=_EPS):
    """Pure-JAX reference mirroring PyTorch Down.forward (NCHW, eval-mode BN).

    conv_operand_dtype=jnp.bfloat16 reproduces the kernel's bf16-operand / f32-accumulate MXU
    matmuls so the kernel structure can be checked to a tight tolerance."""
    def conv(x, w):
        return jax.lax.conv_general_dilated(
            x.astype(conv_operand_dtype), w.astype(conv_operand_dtype),
            window_strides=(1, 1), padding=[(1, 1), (1, 1)],
            dimension_numbers=('NCHW', 'OIHW', 'NCHW'),
            preferred_element_type=jnp.float32)

    def bn(x, p):
        gamma, beta, mean, var = p
        inv = gamma / jnp.sqrt(var + eps)
        return x * inv[None, :, None, None] + (beta - mean * inv)[None, :, None, None]

    gelu = lambda v: jax.nn.gelu(v, approximate=False)
    N, C, H, W = x_nchw.shape
    xp = x_nchw.reshape(N, C, H // 2, 2, W // 2, 2).max(axis=(3, 5))   # MaxPool2d(2)
    h = gelu(bn(conv(xp, raw['w1']), raw['bn1']))
    return gelu(bn(conv(h, raw['w2']), raw['bn2']))


if __name__ == "__main__":
    key = jax.random.PRNGKey(0)
    kx, kp = jax.random.split(key)

    N, Cin, H, W = 2, 4, 16, 16
    Cout = 8            # DoubleConv default: mid_channels == out_channels

    x = jax.random.normal(kx, (N, Cin, H, W), jnp.float32)
    kparams, raw = make_params(kp, Cin, Cout)

    down = jax.jit(down_pallas)
    y = jax.block_until_ready(down(x, kparams))

    # Structural check: reference using the same bf16-operand / f32-accumulate matmuls.
    y_ref_bf16 = ref_forward(x, raw, conv_operand_dtype=jnp.bfloat16)
    np.testing.assert_allclose(np.asarray(y), np.asarray(y_ref_bf16), rtol=5e-3, atol=5e-3)

    # Semantic check vs the pure-f32 PyTorch-style reference; the only difference is bf16
    # MXU-operand quantization (~1% relative).
    y_ref_f32 = ref_forward(x, raw, conv_operand_dtype=jnp.float32)
    np.testing.assert_allclose(np.asarray(y), np.asarray(y_ref_f32), rtol=1e-1, atol=5e-2)

    print("KERNEL_OK")
</pallas_src>

<mosaic_0001>
module attributes {stable_mosaic.version = 11 : i64} {
  func.func @_doubleconv_kernel(%arg0: i32, %arg1: memref<1x8x8x4xf32, #tpu.memory_space<vmem>>, %arg2: memref<36x8xbf16, #tpu.memory_space<vmem>>, %arg3: memref<1x8xf32, #tpu.memory_space<vmem>>, %arg4: memref<1x8xf32, #tpu.memory_space<vmem>>, %arg5: memref<72x8xbf16, #tpu.memory_space<vmem>>, %arg6: memref<1x8xf32, #tpu.memory_space<vmem>>, %arg7: memref<1x8xf32, #tpu.memory_space<vmem>>, %arg8: memref<1x8x64xf32, #tpu.memory_space<vmem>>, %arg9: memref<8x8x36xf32, #tpu.memory_space<vmem>>, %arg10: memref<8x8x72xf32, #tpu.memory_space<vmem>>) attributes {dimension_semantics = [#tpu.dimension_semantics<parallel>], iteration_bounds = array<i64: 2>, scalar_prefetch = 0 : i64, scratch_operands = 2 : i64, tpu.core_type = #tpu.core_type<tc>, window_params = [{transform_indices = @transform_0, window_bounds = array<i64: 1, 8, 8, 4>}, {pipeline_mode = #tpu.pipeline_mode<synchronous>, transform_indices = @transform_1, window_bounds = array<i64: 36, 8>}, {pipeline_mode = #tpu.pipeline_mode<synchronous>, transform_indices = @transform_2, window_bounds = array<i64: 1, 8>}, {pipeline_mode = #tpu.pipeline_mode<synchronous>, transform_indices = @transform_3, window_bounds = array<i64: 1, 8>}, {pipeline_mode = #tpu.pipeline_mode<synchronous>, transform_indices = @transform_4, window_bounds = array<i64: 72, 8>}, {pipeline_mode = #tpu.pipeline_mode<synchronous>, transform_indices = @transform_5, window_bounds = array<i64: 1, 8>}, {pipeline_mode = #tpu.pipeline_mode<synchronous>, transform_indices = @transform_6, window_bounds = array<i64: 1, 8>}, {transform_indices = @transform_7, window_bounds = array<i64: 1, 8, 64>}]} {
    %cst = arith.constant 0.000000e+00 : f32
    %0 = vector.broadcast %cst : f32 to vector<1x8x4xf32>
    %c0 = arith.constant 0 : index
    %c0_0 = arith.constant 0 : index
    %c0_1 = arith.constant 0 : index
    %1 = vector.load %arg9[%c0, %c0_0, %c0_1] : memref<8x8x36xf32, #tpu.memory_space<vmem>>, vector<1x8x4xf32>
    tpu.vector_store %arg9[%c0, %c0_0, %c0_1], %0 {strides = array<i32>} : memref<8x8x36xf32, #tpu.memory_space<vmem>>, vector<1x8x4xf32>,
    %cst_2 = arith.constant 0.000000e+00 : f32
    %2 = vector.broadcast %cst_2 : f32 to vector<8x1x4xf32>
    %c0_3 = arith.constant 0 : index
    %c0_4 = arith.constant 0 : index
    %c0_5 = arith.constant 0 : index
    %3 = vector.load %arg9[%c0_3, %c0_4, %c0_5] : memref<8x8x36xf32, #tpu.memory_space<vmem>>, vector<8x1x4xf32>
    tpu.vector_store %arg9[%c0_3, %c0_4, %c0_5], %2 {strides = array<i32>} : memref<8x8x36xf32, #tpu.memory_space<vmem>>, vector<8x1x4xf32>,
    %c0_6 = arith.constant 0 : index
    %c0_7 = arith.constant 0 : index
    %c0_8 = arith.constant 0 : index
    %c0_9 = arith.constant 0 : index
    %4 = vector.load %arg1[%c0_6, %c0_7, %c0_8, %c0_9] : memref<1x8x8x4xf32, #tpu.memory_space<vmem>>, vector<1x7x7x4xf32>
    %5 = vector.shape_cast %4 : vector<1x7x7x4xf32> to vector<7x7x4xf32>
    %c1 = arith.constant 1 : index
    %c1_10 = arith.constant 1 : index
    %c0_11 = arith.constant 0 : index
    %6 = vector.load %arg9[%c1, %c1_10, %c0_11] : memref<8x8x36xf32, #tpu.memory_space<vmem>>, vector<7x7x4xf32>
    tpu.vector_store %arg9[%c1, %c1_10, %c0_11], %5 {strides = array<i32>} : memref<8x8x36xf32, #tpu.memory_space<vmem>>, vector<7x7x4xf32>,
    %cst_12 = arith.constant 0.000000e+00 : f32
    %7 = vector.broadcast %cst_12 : f32 to vector<1x8x4xf32>
    %c0_13 = arith.constant 0 : index
    %c0_14 = arith.constant 0 : index
    %c4 = arith.constant 4 : index
    %8 = vector.load %arg9[%c0_13, %c0_14, %c4] : memref<8x8x36xf32, #tpu.memory_space<vmem>>, vector<1x8x4xf32>
    tpu.vector_store %arg9[%c0_13, %c0_14, %c4], %7 {strides = array<i32>} : memref<8x8x36xf32, #tpu.memory_space<vmem>>, vector<1x8x4xf32>,
    %c0_15 = arith.constant 0 : index
    %c0_16 = arith.constant 0 : index
    %c0_17 = arith.constant 0 : index
    %c0_18 = arith.constant 0 : index
    %9 = vector.load %arg1[%c0_15, %c0_16, %c0_17, %c0_18] : memref<1x8x8x4xf32, #tpu.memory_space<vmem>>, vector<1x7x8x4xf32>
    %10 = vector.shape_cast %9 : vector<1x7x8x4xf32> to vector<7x8x4xf32>
    %c1_19 = arith.constant 1 : index
    %c0_20 = arith.constant 0 : index
    %c4_21 = arith.constant 4 : index
    %11 = vector.load %arg9[%c1_19, %c0_20, %c4_21] : memref<8x8x36xf32, #tpu.memory_space<vmem>>, vector<7x8x4xf32>
    tpu.vector_store %arg9[%c1_19, %c0_20, %c4_21], %10 {strides = array<i32>} : memref<8x8x36xf32, #tpu.memory_space<vmem>>, vector<7x8x4xf32>,
    %cst_22 = arith.constant 0.000000e+00 : f32
    %12 = vector.broadcast %cst_22 : f32 to vector<1x8x4xf32>
    %c0_23 = arith.constant 0 : index
    %c0_24 = arith.constant 0 : index
    %c8 = arith.constant 8 : index
    %13 = vector.load %arg9[%c0_23, %c0_24, %c8] : memref<8x8x36xf32, #tpu.memory_space<vmem>>, vector<1x8x4xf32>
    tpu.vector_store %arg9[%c0_23, %c0_24, %c8], %12 {strides = array<i32>} : memref<8x8x36xf32, #tpu.memory_space<vmem>>, vector<1x8x4xf32>,
    %cst_25 = arith.constant 0.000000e+00 : f32
    %14 = vector.broadcast %cst_25 : f32 to vector<8x1x4xf32>
    %c0_26 = arith.constant 0 : index
    %c7 = arith.constant 7 : index
    %c8_27 = arith.constant 8 : index
    %15 = vector.load %arg9[%c0_26, %c7, %c8_27] : memref<8x8x36xf32, #tpu.memory_space<vmem>>, vector<8x1x4xf32>
    tpu.vector_store %arg9[%c0_26, %c7, %c8_27], %14 {strides = array<i32>} : memref<8x8x36xf32, #tpu.memory_space<vmem>>, vector<8x1x4xf32>,
    %c0_28 = arith.constant 0 : index
    %c0_29 = arith.constant 0 : index
    %c1_30 = arith.constant 1 : index
    %c0_31 = arith.constant 0 : index
    %16 = vector.load %arg1[%c0_28, %c0_29, %c1_30, %c0_31] : memref<1x8x8x4xf32, #tpu.memory_space<vmem>>, vector<1x7x7x4xf32>
    %17 = vector.shape_cast %16 : vector<1x7x7x4xf32> to vector<7x7x4xf32>
    %c1_32 = arith.constant 1 : index
    %c0_33 = arith.constant 0 : index
    %c8_34 = arith.constant 8 : index
    %18 = vector.load %arg9[%c1_32, %c0_33, %c8_34] : memref<8x8x36xf32, #tpu.memory_space<vmem>>, vector<7x7x4xf32>
    tpu.vector_store %arg9[%c1_32, %c0_33, %c8_34], %17 {strides = array<i32>} : memref<8x8x36xf32, #tpu.memory_space<vmem>>, vector<7x7x4xf32>,
    %cst_35 = arith.constant 0.000000e+00 : f32
    %19 = vector.broadcast %cst_35 : f32 to vector<8x1x4xf32>
    %c0_36 = arith.constant 0 : index
    %c0_37 = arith.constant 0 : index
    %c12 = arith.constant 12 : index
    %20 = vector.load %arg9[%c0_36, %c0_37, %c12] : memref<8x8x36xf32, #tpu.memory_space<vmem>>, vector<8x1x4xf32>
    tpu.vector_store %arg9[%c0_36, %c0_37, %c12], %19 {strides = array<i32>} : memref<8x8x36xf32, #tpu.memory_space<vmem>>, vector<8x1x4xf32>,
    %c0_38 = arith.constant 0 : index
    %c0_39 = arith.constant 0 : index
    %c0_40 = arith.constant 0 : index
    %c0_41 = arith.constant 0 : index
    %21 = vector.load %arg1[%c0_38, %c0_39, %c0_40, %c0_41] : memref<1x8x8x4xf32, #tpu.memory_space<vmem>>, vector<1x8x7x4xf32>
    %22 = vector.shape_cast %21 : vector<1x8x7x4xf32> to vector<8x7x4xf32>
    %c0_42 = arith.constant 0 : index
    %c1_43 = arith.constant 1 : index
    %c12_44 = arith.constant 12 : index
    %23 = vector.load %arg9[%c0_42, %c1_43, %c12_44] : memref<8x8x36xf32, #tpu.memory_space<vmem>>, vector<8x7x4xf32>
    tpu.vector_store %arg9[%c0_42, %c1_43, %c12_44], %22 {strides = array<i32>} : memref<8x8x36xf32, #tpu.memory_space<vmem>>, vector<8x7x4xf32>,
    %c0_45 = arith.constant 0 : index
    %c0_46 = arith.constant 0 : index
    %c0_47 = arith.constant 0 : index
    %c0_48 = arith.constant 0 : index
    %24 = vector.load %arg1[%c0_45, %c0_46, %c0_47, %c0_48] : memref<1x8x8x4xf32, #tpu.memory_space<vmem>>, vector<1x8x8x4xf32>
    %25 = vector.shape_cast %24 : vector<1x8x8x4xf32> to vector<8x8x4xf32>
    %c0_49 = arith.constant 0 : index
    %c0_50 = arith.constant 0 : index
    %c16 = arith.constant 16 : index
    %26 = vector.load %arg9[%c0_49, %c0_50, %c16] : memref<8x8x36xf32, #tpu.memory_space<vmem>>, vector<8x8x4xf32>
    tpu.vector_store %arg9[%c0_49, %c0_50, %c16], %25 {strides = array<i32>} : memref<8x8x36xf32, #tpu.memory_space<vmem>>, vector<8x8x4xf32>,
    %cst_51 = arith.constant 0.000000e+00 : f32
    %27 = vector.broadcast %cst_51 : f32 to vector<8x1x4xf32>
    %c0_52 = arith.constant 0 : index
    %c7_53 = arith.constant 7 : index
    %c20 = arith.constant 20 : index
    %28 = vector.load %arg9[%c0_52, %c7_53, %c20] : memref<8x8x36xf32, #tpu.memory_space<vmem>>, vector<8x1x4xf32>
    tpu.vector_store %arg9[%c0_52, %c7_53, %c20], %27 {strides = array<i32>} : memref<8x8x36xf32, #tpu.memory_space<vmem>>, vector<8x1x4xf32>,
    %c0_54 = arith.constant 0 : index
    %c0_55 = arith.constant 0 : index
    %c1_56 = arith.constant 1 : index
    %c0_57 = arith.constant 0 : index
    %29 = vector.load %arg1[%c0_54, %c0_55, %c1_56, %c0_57] : memref<1x8x8x4xf32, #tpu.memory_space<vmem>>, vector<1x8x7x4xf32>
    %30 = vector.shape_cast %29 : vector<1x8x7x4xf32> to vector<8x7x4xf32>
    %c0_58 = arith.constant 0 : index
    %c0_59 = arith.constant 0 : index
    %c20_60 = arith.constant 20 : index
    %31 = vector.load %arg9[%c0_58, %c0_59, %c20_60] : memref<8x8x36xf32, #tpu.memory_space<vmem>>, vector<8x7x4xf32>
    tpu.vector_store %arg9[%c0_58, %c0_59, %c20_60], %30 {strides = array<i32>} : memref<8x8x36xf32, #tpu.memory_space<vmem>>, vector<8x7x4xf32>,
    %cst_61 = arith.constant 0.000000e+00 : f32
    %32 = vector.broadcast %cst_61 : f32 to vector<1x8x4xf32>
    %c7_62 = arith.constant 7 : index
    %c0_63 = arith.constant 0 : index
    %c24 = arith.constant 24 : index
    %33 = vector.load %arg9[%c7_62, %c0_63, %c24] : memref<8x8x36xf32, #tpu.memory_space<vmem>>, vector<1x8x4xf32>
    tpu.vector_store %arg9[%c7_62, %c0_63, %c24], %32 {strides = array<i32>} : memref<8x8x36xf32, #tpu.memory_space<vmem>>, vector<1x8x4xf32>,
    %cst_64 = arith.constant 0.000000e+00 : f32
    %34 = vector.broadcast %cst_64 : f32 to vector<8x1x4xf32>
    %c0_65 = arith.constant 0 : index
    %c0_66 = arith.constant 0 : index
    %c24_67 = arith.constant 24 : index
    %35 = vector.load %arg9[%c0_65, %c0_66, %c24_67] : memref<8x8x36xf32, #tpu.memory_space<vmem>>, vector<8x1x4xf32>
    tpu.vector_store %arg9[%c0_65, %c0_66, %c24_67], %34 {strides = array<i32>} : memref<8x8x36xf32, #tpu.memory_space<vmem>>, vector<8x1x4xf32>,
    %c0_68 = arith.constant 0 : index
    %c1_69 = arith.constant 1 : index
    %c0_70 = arith.constant 0 : index
    %c0_71 = arith.constant 0 : index
    %36 = vector.load %arg1[%c0_68, %c1_69, %c0_70, %c0_71] : memref<1x8x8x4xf32, #tpu.memory_space<vmem>>, vector<1x7x7x4xf32>
    %37 = vector.shape_cast %36 : vector<1x7x7x4xf32> to vector<7x7x4xf32>
    %c0_72 = arith.constant 0 : index
    %c1_73 = arith.constant 1 : index
    %c24_74 = arith.constant 24 : index
    %38 = vector.load %arg9[%c0_72, %c1_73, %c24_74] : memref<8x8x36xf32, #tpu.memory_space<vmem>>, vector<7x7x4xf32>
    tpu.vector_store %arg9[%c0_72, %c1_73, %c24_74], %37 {strides = array<i32>} : memref<8x8x36xf32, #tpu.memory_space<vmem>>, vector<7x7x4xf32>,
    %cst_75 = arith.constant 0.000000e+00 : f32
    %39 = vector.broadcast %cst_75 : f32 to vector<1x8x4xf32>
    %c7_76 = arith.constant 7 : index
    %c0_77 = arith.constant 0 : index
    %c28 = arith.constant 28 : index
    %40 = vector.load %arg9[%c7_76, %c0_77, %c28] : memref<8x8x36xf32, #tpu.memory_space<vmem>>, vector<1x8x4xf32>
    tpu.vector_store %arg9[%c7_76, %c0_77, %c28], %39 {strides = array<i32>} : memref<8x8x36xf32, #tpu.memory_space<vmem>>, vector<1x8x4xf32>,
    %c0_78 = arith.constant 0 : index
    %c1_79 = arith.constant 1 : index
    %c0_80 = arith.constant 0 : index
    %c0_81 = arith.constant 0 : index
    %41 = vector.load %arg1[%c0_78, %c1_79, %c0_80, %c0_81] : memref<1x8x8x4xf32, #tpu.memory_space<vmem>>, vector<1x7x8x4xf32>
    %42 = vector.shape_cast %41 : vector<1x7x8x4xf32> to vector<7x8x4xf32>
    %c0_82 = arith.constant 0 : index
    %c0_83 = arith.constant 0 : index
    %c28_84 = arith.constant 28 : index
    %43 = vector.load %arg9[%c0_82, %c0_83, %c28_84] : memref<8x8x36xf32, #tpu.memory_space<vmem>>, vector<7x8x4xf32>
    tpu.vector_store %arg9[%c0_82, %c0_83, %c28_84], %42 {strides = array<i32>} : memref<8x8x36xf32, #tpu.memory_space<vmem>>, vector<7x8x4xf32>,
    %cst_85 = arith.constant 0.000000e+00 : f32
    %44 = vector.broadcast %cst_85 : f32 to vector<1x8x4xf32>
    %c7_86 = arith.constant 7 : index
    %c0_87 = arith.constant 0 : index
    %c32 = arith.constant 32 : index
    %45 = vector.load %arg9[%c7_86, %c0_87, %c32] : memref<8x8x36xf32, #tpu.memory_space<vmem>>, vector<1x8x4xf32>
    tpu.vector_store %arg9[%c7_86, %c0_87, %c32], %44 {strides = array<i32>} : memref<8x8x36xf32, #tpu.memory_space<vmem>>, vector<1x8x4xf32>,
    %cst_88 = arith.constant 0.000000e+00 : f32
    %46 = vector.broadcast %cst_88 : f32 to vector<8x1x4xf32>
    %c0_89 = arith.constant 0 : index
    %c7_90 = arith.constant 7 : index
    %c32_91 = arith.constant 32 : index
    %47 = vector.load %arg9[%c0_89, %c7_90, %c32_91] : memref<8x8x36xf32, #tpu.memory_space<vmem>>, vector<8x1x4xf32>
    tpu.vector_store %arg9[%c0_89, %c7_90, %c32_91], %46 {strides = array<i32>} : memref<8x8x36xf32, #tpu.memory_space<vmem>>, vector<8x1x4xf32>,
    %c0_92 = arith.constant 0 : index
    %c1_93 = arith.constant 1 : index
    %c1_94 = arith.constant 1 : index
    %c0_95 = arith.constant 0 : index
    %48 = vector.load %arg1[%c0_92, %c1_93, %c1_94, %c0_95] : memref<1x8x8x4xf32, #tpu.memory_space<vmem>>, vector<1x7x7x4xf32>
    %49 = vector.shape_cast %48 : vector<1x7x7x4xf32> to vector<7x7x4xf32>
    %c0_96 = arith.constant 0 : index
    %c0_97 = arith.constant 0 : index
    %c32_98 = arith.constant 32 : index
    %50 = vector.load %arg9[%c0_96, %c0_97, %c32_98] : memref<8x8x36xf32, #tpu.memory_space<vmem>>, vector<7x7x4xf32>
    tpu.vector_store %arg9[%c0_96, %c0_97, %c32_98], %49 {strides = array<i32>} : memref<8x8x36xf32, #tpu.memory_space<vmem>>, vector<7x7x4xf32>,
    %c0_99 = arith.constant 0 : index
    %c0_100 = arith.constant 0 : index
    %c0_101 = arith.constant 0 : index
    %51 = vector.load %arg9[%c0_99, %c0_100, %c0_101] : memref<8x8x36xf32, #tpu.memory_space<vmem>>, vector<8x8x36xf32>
    %52 = vector.shape_cast %51 : vector<8x8x36xf32> to vector<64x36xf32>
    %53 = arith.truncf %52 : vector<64x36xf32> to vector<64x36xbf16>
    %c0_102 = arith.constant 0 : index
    %c0_103 = arith.constant 0 : index
    %54 = vector.load %arg2[%c0_102, %c0_103] : memref<36x8xbf16, #tpu.memory_space<vmem>>, vector<36x8xbf16>
    %cst_104 = arith.constant dense<0.000000e+00> : vector<64x8xf32>
    %55 = tpu.matmul %53, %54, %cst_104 {dimension_numbers = #tpu.dot_dimension_numbers<[1], [0], [0], [1], [0, 0, 1, 1], [], []>} : vector<64x36xbf16>, vector<36x8xbf16>, vector<64x8xf32> -> vector<64x8xf32>
    %c0_105 = arith.constant 0 : index
    %c0_106 = arith.constant 0 : index
    %56 = vector.load %arg3[%c0_105, %c0_106] : memref<1x8xf32, #tpu.memory_space<vmem>>, vector<1x8xf32>
    %57 = vector.broadcast %56 : vector<1x8xf32> to vector<64x8xf32>
    %58 = arith.mulf %55, %57 : vector<64x8xf32>
    %c0_107 = arith.constant 0 : index
    %c0_108 = arith.constant 0 : index
    %59 = vector.load %arg4[%c0_107, %c0_108] : memref<1x8xf32, #tpu.memory_space<vmem>>, vector<1x8xf32>
    %60 = vector.broadcast %59 : vector<1x8xf32> to vector<64x8xf32>
    %61 = arith.addf %58, %60 : vector<64x8xf32>
    %cst_109 = arith.constant 5.000000e-01 : f32
    %62 = vector.broadcast %cst_109 : f32 to vector<64x8xf32>
    %63 = arith.mulf %62, %61 : vector<64x8xf32>
    %cst_110 = arith.constant 0.707106769 : f32
    %64 = vector.broadcast %cst_110 : f32 to vector<64x8xf32>
    %65 = arith.mulf %61, %64 : vector<64x8xf32>
    %66 = math.erf %65 : vector<64x8xf32>
    %cst_111 = arith.constant 1.000000e+00 : f32
    %67 = vector.broadcast %cst_111 : f32 to vector<64x8xf32>
    %68 = arith.addf %67, %66 : vector<64x8xf32>
    %69 = arith.mulf %63, %68 : vector<64x8xf32>
    %70 = vector.shape_cast %69 : vector<64x8xf32> to vector<8x8x8xf32>
    %cst_112 = arith.constant 0.000000e+00 : f32
    %71 = vector.broadcast %cst_112 : f32 to vector<1x8x8xf32>
    %c0_113 = arith.constant 0 : index
    %c0_114 = arith.constant 0 : index
    %c0_115 = arith.constant 0 : index
    %72 = vector.load %arg10[%c0_113, %c0_114, %c0_115] : memref<8x8x72xf32, #tpu.memory_space<vmem>>, vector<1x8x8xf32>
    tpu.vector_store %arg10[%c0_113, %c0_114, %c0_115], %71 {strides = array<i32>} : memref<8x8x72xf32, #tpu.memory_space<vmem>>, vector<1x8x8xf32>,
    %cst_116 = arith.constant 0.000000e+00 : f32
    %73 = vector.broadcast %cst_116 : f32 to vector<8x1x8xf32>
    %c0_117 = arith.constant 0 : index
    %c0_118 = arith.constant 0 : index
    %c0_119 = arith.constant 0 : index
    %74 = vector.load %arg10[%c0_117, %c0_118, %c0_119] : memref<8x8x72xf32, #tpu.memory_space<vmem>>, vector<8x1x8xf32>
    tpu.vector_store %arg10[%c0_117, %c0_118, %c0_119], %73 {strides = array<i32>} : memref<8x8x72xf32, #tpu.memory_space<vmem>>, vector<8x1x8xf32>,
    %75 = vector.extract_strided_slice %70 {offsets = [0, 0, 0], sizes = [7, 7, 8], strides = [1, 1, 1]} : vector<8x8x8xf32> to vector<7x7x8xf32>
    %c1_120 = arith.constant 1 : index
    %c1_121 = arith.constant 1 : index
    %c0_122 = arith.constant 0 : index
    %76 = vector.load %arg10[%c1_120, %c1_121, %c0_122] : memref<8x8x72xf32, #tpu.memory_space<vmem>>, vector<7x7x8xf32>
    tpu.vector_store %arg10[%c1_120, %c1_121, %c0_122], %75 {strides = array<i32>} : memref<8x8x72xf32, #tpu.memory_space<vmem>>, vector<7x7x8xf32>,
    %cst_123 = arith.constant 0.000000e+00 : f32
    %77 = vector.broadcast %cst_123 : f32 to vector<1x8x8xf32>
    %c0_124 = arith.constant 0 : index
    %c0_125 = arith.constant 0 : index
    %c8_126 = arith.constant 8 : index
    %78 = vector.load %arg10[%c0_124, %c0_125, %c8_126] : memref<8x8x72xf32, #tpu.memory_space<vmem>>, vector<1x8x8xf32>
    tpu.vector_store %arg10[%c0_124, %c0_125, %c8_126], %77 {strides = array<i32>} : memref<8x8x72xf32, #tpu.memory_space<vmem>>, vector<1x8x8xf32>,
    %79 = vector.extract_strided_slice %70 {offsets = [0, 0, 0], sizes = [7, 8, 8], strides = [1, 1, 1]} : vector<8x8x8xf32> to vector<7x8x8xf32>
    %c1_127 = arith.constant 1 : index
    %c0_128 = arith.constant 0 : index
    %c8_129 = arith.constant 8 : index
    %80 = vector.load %arg10[%c1_127, %c0_128, %c8_129] : memref<8x8x72xf32, #tpu.memory_space<vmem>>, vector<7x8x8xf32>
    tpu.vector_store %arg10[%c1_127, %c0_128, %c8_129], %79 {strides = array<i32>} : memref<8x8x72xf32, #tpu.memory_space<vmem>>, vector<7x8x8xf32>,
    %cst_130 = arith.constant 0.000000e+00 : f32
    %81 = vector.broadcast %cst_130 : f32 to vector<1x8x8xf32>
    %c0_131 = arith.constant 0 : index
    %c0_132 = arith.constant 0 : index
    %c16_133 = arith.constant 16 : index
    %82 = vector.load %arg10[%c0_131, %c0_132, %c16_133] : memref<8x8x72xf32, #tpu.memory_space<vmem>>, vector<1x8x8xf32>
    tpu.vector_store %arg10[%c0_131, %c0_132, %c16_133], %81 {strides = array<i32>} : memref<8x8x72xf32, #tpu.memory_space<vmem>>, vector<1x8x8xf32>,
    %cst_134 = arith.constant 0.000000e+00 : f32
    %83 = vector.broadcast %cst_134 : f32 to vector<8x1x8xf32>
    %c0_135 = arith.constant 0 : index
    %c7_136 = arith.constant 7 : index
    %c16_137 = arith.constant 16 : index
    %84 = vector.load %arg10[%c0_135, %c7_136, %c16_137] : memref<8x8x72xf32, #tpu.memory_space<vmem>>, vector<8x1x8xf32>
    tpu.vector_store %arg10[%c0_135, %c7_136, %c16_137], %83 {strides = array<i32>} : memref<8x8x72xf32, #tpu.memory_space<vmem>>, vector<8x1x8xf32>,
    %85 = vector.extract_strided_slice %70 {offsets = [0, 1, 0], sizes = [7, 7, 8], strides = [1, 1, 1]} : vector<8x8x8xf32> to vector<7x7x8xf32>
    %c1_138 = arith.constant 1 : index
    %c0_139 = arith.constant 0 : index
    %c16_140 = arith.constant 16 : index
    %86 = vector.load %arg10[%c1_138, %c0_139, %c16_140] : memref<8x8x72xf32, #tpu.memory_space<vmem>>, vector<7x7x8xf32>
    tpu.vector_store %arg10[%c1_138, %c0_139, %c16_140], %85 {strides = array<i32>} : memref<8x8x72xf32, #tpu.memory_space<vmem>>, vector<7x7x8xf32>,
    %cst_141 = arith.constant 0.000000e+00 : f32
    %87 = vector.broadcast %cst_141 : f32 to vector<8x1x8xf32>
    %c0_142 = arith.constant 0 : index
    %c0_143 = arith.constant 0 : index
    %c24_144 = arith.constant 24 : index
    %88 = vector.load %arg10[%c0_142, %c0_143, %c24_144] : memref<8x8x72xf32, #tpu.memory_space<vmem>>, vector<8x1x8xf32>
    tpu.vector_store %arg10[%c0_142, %c0_143, %c24_144], %87 {strides = array<i32>} : memref<8x8x72xf32, #tpu.memory_space<vmem>>, vector<8x1x8xf32>,
    %89 = vector.extract_strided_slice %70 {offsets = [0, 0, 0], sizes = [8, 7, 8], strides = [1, 1, 1]} : vector<8x8x8xf32> to vector<8x7x8xf32>
    %c0_145 = arith.constant 0 : index
    %c1_146 = arith.constant 1 : index
    %c24_147 = arith.constant 24 : index
    %90 = vector.load %arg10[%c0_145, %c1_146, %c24_147] : memref<8x8x72xf32, #tpu.memory_space<vmem>>, vector<8x7x8xf32>
    tpu.vector_store %arg10[%c0_145, %c1_146, %c24_147], %89 {strides = array<i32>} : memref<8x8x72xf32, #tpu.memory_space<vmem>>, vector<8x7x8xf32>,
    %c0_148 = arith.constant 0 : index
    %c0_149 = arith.constant 0 : index
    %c32_150 = arith.constant 32 : index
    %91 = vector.load %arg10[%c0_148, %c0_149, %c32_150] : memref<8x8x72xf32, #tpu.memory_space<vmem>>, vector<8x8x8xf32>
    tpu.vector_store %arg10[%c0_148, %c0_149, %c32_150], %70 {strides = array<i32>} : memref<8x8x72xf32, #tpu.memory_space<vmem>>, vector<8x8x8xf32>,
    %cst_151 = arith.constant 0.000000e+00 : f32
    %92 = vector.broadcast %cst_151 : f32 to vector<8x1x8xf32>
    %c0_152 = arith.constant 0 : index
    %c7_153 = arith.constant 7 : index
    %c40 = arith.constant 40 : index
    %93 = vector.load %arg10[%c0_152, %c7_153, %c40] : memref<8x8x72xf32, #tpu.memory_space<vmem>>, vector<8x1x8xf32>
    tpu.vector_store %arg10[%c0_152, %c7_153, %c40], %92 {strides = array<i32>} : memref<8x8x72xf32, #tpu.memory_space<vmem>>, vector<8x1x8xf32>,
    %94 = vector.extract_strided_slice %70 {offsets = [0, 1, 0], sizes = [8, 7, 8], strides = [1, 1, 1]} : vector<8x8x8xf32> to vector<8x7x8xf32>
    %c0_154 = arith.constant 0 : index
    %c0_155 = arith.constant 0 : index
    %c40_156 = arith.constant 40 : index
    %95 = vector.load %arg10[%c0_154, %c0_155, %c40_156] : memref<8x8x72xf32, #tpu.memory_space<vmem>>, vector<8x7x8xf32>
    tpu.vector_store %arg10[%c0_154, %c0_155, %c40_156], %94 {strides = array<i32>} : memref<8x8x72xf32, #tpu.memory_space<vmem>>, vector<8x7x8xf32>,
    %cst_157 = arith.constant 0.000000e+00 : f32
    %96 = vector.broadcast %cst_157 : f32 to vector<1x8x8xf32>
    %c7_158 = arith.constant 7 : index
    %c0_159 = arith.constant 0 : index
    %c48 = arith.constant 48 : index
    %97 = vector.load %arg10[%c7_158, %c0_159, %c48] : memref<8x8x72xf32, #tpu.memory_space<vmem>>, vector<1x8x8xf32>
    tpu.vector_store %arg10[%c7_158, %c0_159, %c48], %96 {strides = array<i32>} : memref<8x8x72xf32, #tpu.memory_space<vmem>>, vector<1x8x8xf32>,
    %cst_160 = arith.constant 0.000000e+00 : f32
    %98 = vector.broadcast %cst_160 : f32 to vector<8x1x8xf32>
    %c0_161 = arith.constant 0 : index
    %c0_162 = arith.constant 0 : index
    %c48_163 = arith.constant 48 : index
    %99 = vector.load %arg10[%c0_161, %c0_162, %c48_163] : memref<8x8x72xf32, #tpu.memory_space<vmem>>, vector<8x1x8xf32>
    tpu.vector_store %arg10[%c0_161, %c0_162, %c48_163], %98 {strides = array<i32>} : memref<8x8x72xf32, #tpu.memory_space<vmem>>, vector<8x1x8xf32>,
    %100 = vector.extract_strided_slice %70 {offsets = [1, 0, 0], sizes = [7, 7, 8], strides = [1, 1, 1]} : vector<8x8x8xf32> to vector<7x7x8xf32>
    %c0_164 = arith.constant 0 : index
    %c1_165 = arith.constant 1 : index
    %c48_166 = arith.constant 48 : index
    %101 = vector.load %arg10[%c0_164, %c1_165, %c48_166] : memref<8x8x72xf32, #tpu.memory_space<vmem>>, vector<7x7x8xf32>
    tpu.vector_store %arg10[%c0_164, %c1_165, %c48_166], %100 {strides = array<i32>} : memref<8x8x72xf32, #tpu.memory_space<vmem>>, vector<7x7x8xf32>,
    %cst_167 = arith.constant 0.000000e+00 : f32
    %102 = vector.broadcast %cst_167 : f32 to vector<1x8x8xf32>
    %c7_168 = arith.constant 7 : index
    %c0_169 = arith.constant 0 : index
    %c56 = arith.constant 56 : index
    %103 = vector.load %arg10[%c7_168, %c0_169, %c56] : memref<8x8x72xf32, #tpu.memory_space<vmem>>, vector<1x8x8xf32>
    tpu.vector_store %arg10[%c7_168, %c0_169, %c56], %102 {strides = array<i32>} : memref<8x8x72xf32, #tpu.memory_space<vmem>>, vector<1x8x8xf32>,
    %104 = vector.extract_strided_slice %70 {offsets = [1, 0, 0], sizes = [7, 8, 8], strides = [1, 1, 1]} : vector<8x8x8xf32> to vector<7x8x8xf32>
    %c0_170 = arith.constant 0 : index
    %c0_171 = arith.constant 0 : index
    %c56_172 = arith.constant 56 : index
    %105 = vector.load %arg10[%c0_170, %c0_171, %c56_172] : memref<8x8x72xf32, #tpu.memory_space<vmem>>, vector<7x8x8xf32>
    tpu.vector_store %arg10[%c0_170, %c0_171, %c56_172], %104 {strides = array<i32>} : memref<8x8x72xf32, #tpu.memory_space<vmem>>, vector<7x8x8xf32>,
    %cst_173 = arith.constant 0.000000e+00 : f32
    %106 = vector.broadcast %cst_173 : f32 to vector<1x8x8xf32>
    %c7_174 = arith.constant 7 : index
    %c0_175 = arith.constant 0 : index
    %c64 = arith.constant 64 : index
    %107 = vector.load %arg10[%c7_174, %c0_175, %c64] : memref<8x8x72xf32, #tpu.memory_space<vmem>>, vector<1x8x8xf32>
    tpu.vector_store %arg10[%c7_174, %c0_175, %c64], %106 {strides = array<i32>} : memref<8x8x72xf32, #tpu.memory_space<vmem>>, vector<1x8x8xf32>,
    %cst_176 = arith.constant 0.000000e+00 : f32
    %108 = vector.broadcast %cst_176 : f32 to vector<8x1x8xf32>
    %c0_177 = arith.constant 0 : index
    %c7_178 = arith.constant 7 : index
    %c64_179 = arith.constant 64 : index
    %109 = vector.load %arg10[%c0_177, %c7_178, %c64_179] : memref<8x8x72xf32, #tpu.memory_space<vmem>>, vector<8x1x8xf32>
    tpu.vector_store %arg10[%c0_177, %c7_178, %c64_179], %108 {strides = array<i32>} : memref<8x8x72xf32, #tpu.memory_space<vmem>>, vector<8x1x8xf32>,
    %110 = vector.extract_strided_slice %70 {offsets = [1, 1, 0], sizes = [7, 7, 8], strides = [1, 1, 1]} : vector<8x8x8xf32> to vector<7x7x8xf32>
    %c0_180 = arith.constant 0 : index
    %c0_181 = arith.constant 0 : index
    %c64_182 = arith.constant 64 : index
    %111 = vector.load %arg10[%c0_180, %c0_181, %c64_182] : memref<8x8x72xf32, #tpu.memory_space<vmem>>, vector<7x7x8xf32>
    tpu.vector_store %arg10[%c0_180, %c0_181, %c64_182], %110 {strides = array<i32>} : memref<8x8x72xf32, #tpu.memory_space<vmem>>, vector<7x7x8xf32>,
    %c0_183 = arith.constant 0 : index
    %c0_184 = arith.constant 0 : index
    %c0_185 = arith.constant 0 : index
    %112 = vector.load %arg10[%c0_183, %c0_184, %c0_185] : memref<8x8x72xf32, #tpu.memory_space<vmem>>, vector<8x8x72xf32>
    %113 = vector.shape_cast %112 : vector<8x8x72xf32> to vector<64x72xf32>
    %114 = arith.truncf %113 : vector<64x72xf32> to vector<64x72xbf16>
    %c0_186 = arith.constant 0 : index
    %c0_187 = arith.constant 0 : index
    %115 = vector.load %arg5[%c0_186, %c0_187] : memref<72x8xbf16, #tpu.memory_space<vmem>>, vector<72x8xbf16>
    %cst_188 = arith.constant dense<0.000000e+00> : vector<64x8xf32>
    %116 = tpu.matmul %114, %115, %cst_188 {dimension_numbers = #tpu.dot_dimension_numbers<[1], [0], [0], [1], [0, 0, 1, 1], [], []>} : vector<64x72xbf16>, vector<72x8xbf16>, vector<64x8xf32> -> vector<64x8xf32>
    %c0_189 = arith.constant 0 : index
    %c0_190 = arith.constant 0 : index
    %117 = vector.load %arg6[%c0_189, %c0_190] : memref<1x8xf32, #tpu.memory_space<vmem>>, vector<1x8xf32>
    %118 = vector.broadcast %117 : vector<1x8xf32> to vector<64x8xf32>
    %119 = arith.mulf %116, %118 : vector<64x8xf32>
    %c0_191 = arith.constant 0 : index
    %c0_192 = arith.constant 0 : index
    %120 = vector.load %arg7[%c0_191, %c0_192] : memref<1x8xf32, #tpu.memory_space<vmem>>, vector<1x8xf32>
    %121 = vector.broadcast %120 : vector<1x8xf32> to vector<64x8xf32>
    %122 = arith.addf %119, %121 : vector<64x8xf32>
    %cst_193 = arith.constant 5.000000e-01 : f32
    %123 = vector.broadcast %cst_193 : f32 to vector<64x8xf32>
    %124 = arith.mulf %123, %122 : vector<64x8xf32>
    %cst_194 = arith.constant 0.707106769 : f32
    %125 = vector.broadcast %cst_194 : f32 to vector<64x8xf32>
    %126 = arith.mulf %122, %125 : vector<64x8xf32>
    %127 = math.erf %126 : vector<64x8xf32>
    %cst_195 = arith.constant 1.000000e+00 : f32
    %128 = vector.broadcast %cst_195 : f32 to vector<64x8xf32>
    %129 = arith.addf %128, %127 : vector<64x8xf32>
    %130 = arith.mulf %124, %129 : vector<64x8xf32>
    %131 = tpu.transpose %130, [1, 0] : vector<64x8xf32> -> vector<8x64xf32>
    %c0_196 = arith.constant 0 : index
    %c0_197 = arith.constant 0 : index
    %c0_198 = arith.constant 0 : index
    %132 = vector.load %arg8[%c0_196, %c0_197, %c0_198] : memref<1x8x64xf32, #tpu.memory_space<vmem>>, vector<1x8x64xf32>
    %133 = vector.shape_cast %132 : vector<1x8x64xf32> to vector<8x64xf32>
    %134 = vector.shape_cast %131 : vector<8x64xf32> to vector<1x8x64xf32>
    tpu.vector_store %arg8[%c0_196, %c0_197, %c0_198], %134 {strides = array<i32>} : memref<1x8x64xf32, #tpu.memory_space<vmem>>, vector<1x8x64xf32>,
    return
  }
  func.func @transform_0(%arg0: i32) -> (i32, i32, i32, i32) {
    %c0_i32 = arith.constant 0 : i32
    %c0_i32_0 = arith.constant 0 : i32
    %c0_i32_1 = arith.constant 0 : i32
    %c0_i32_2 = arith.constant 0 : i32
    return %arg0, %c0_i32, %c0_i32_0, %c0_i32_1 : i32, i32, i32, i32
  }
  func.func @transform_1(%arg0: i32) -> (i32, i32) {
    %c0_i32 = arith.constant 0 : i32
    %c0_i32_0 = arith.constant 0 : i32
    %c0_i32_1 = arith.constant 0 : i32
    return %c0_i32, %c0_i32_0 : i32, i32
  }
  func.func @transform_2(%arg0: i32) -> (i32, i32) {
    %c0_i32 = arith.constant 0 : i32
    %c0_i32_0 = arith.constant 0 : i32
    %c0_i32_1 = arith.constant 0 : i32
    return %c0_i32, %c0_i32_0 : i32, i32
  }
  func.func @transform_3(%arg0: i32) -> (i32, i32) {
    %c0_i32 = arith.constant 0 : i32
    %c0_i32_0 = arith.constant 0 : i32
    %c0_i32_1 = arith.constant 0 : i32
    return %c0_i32, %c0_i32_0 : i32, i32
  }
  func.func @transform_4(%arg0: i32) -> (i32, i32) {
    %c0_i32 = arith.constant 0 : i32
    %c0_i32_0 = arith.constant 0 : i32
    %c0_i32_1 = arith.constant 0 : i32
    return %c0_i32, %c0_i32_0 : i32, i32
  }
  func.func @transform_5(%arg0: i32) -> (i32, i32) {
    %c0_i32 = arith.constant 0 : i32
    %c0_i32_0 = arith.constant 0 : i32
    %c0_i32_1 = arith.constant 0 : i32
    return %c0_i32, %c0_i32_0 : i32, i32
  }
  func.func @transform_6(%arg0: i32) -> (i32, i32) {
    %c0_i32 = arith.constant 0 : i32
    %c0_i32_0 = arith.constant 0 : i32
    %c0_i32_1 = arith.constant 0 : i32
    return %c0_i32, %c0_i32_0 : i32, i32
  }
  func.func @transform_7(%arg0: i32) -> (i32, i32, i32) {
    %c0_i32 = arith.constant 0 : i32
    %c0_i32_0 = arith.constant 0 : i32
    %c0_i32_1 = arith.constant 0 : i32
    return %arg0, %c0_i32, %c0_i32_0 : i32, i32, i32
  }
}

</mosaic_0001>

<llo_original>
// kernel: down_pallas.1
$region0: #{down_pallas.1}
  #allocation0 [shape = 'u32[]', space=smem, size = 0x4, offset = 0x4, fixed_abs, tag = 'smem constant byte address 0x4 - core index']
  #allocation1 [shape = 'u32[144,128]{1,0:T(1,128)}', space=vmem, size = 0x12000, scoped, tag = 'internal scratch']
  #allocation2 [shape = 'f32[8,8,36]{2,1,0:T(8,128)}', space=vmem, size = 0x8000, scoped, tag = 'scratch operand']
  #allocation3 [shape = 'f32[8,8,72]{2,1,0:T(8,128)}', space=vmem, size = 0x8000, scoped, tag = 'scratch operand']
  %s0 = inlined_call_operand.vmem [shape: f32[2,8,8,4], index: 0, kind: input, shape index: {}]
  %s1 = inlined_call_operand.vmem [shape: bf16[36,8], index: 1, kind: input, shape index: {}]
  %s2 = inlined_call_operand.vmem [shape: f32[1,8], index: 2, kind: input, shape index: {}]
  %s3 = inlined_call_operand.vmem [shape: f32[1,8], index: 3, kind: input, shape index: {}]
  %s4 = inlined_call_operand.vmem [shape: bf16[72,8], index: 4, kind: input, shape index: {}]
  %s5 = inlined_call_operand.vmem [shape: f32[1,8], index: 5, kind: input, shape index: {}]
  %s6 = inlined_call_operand.vmem [shape: f32[1,8], index: 6, kind: input, shape index: {}]
  %s7 = inlined_call_operand.vmem [shape: f32[2,8,64], index: 7, kind: output, shape index: {}]
  %s8 = sld [smem:[#allocation0]]
  $region61: #{down_pallas.1} parent=0
    _
  %s10 = ssub.s32 1, %s8
  %s11 = scalar_select 0, %s10, %s8
  loop: start=0, step=1, limit=4
  $region2: #{down_pallas.1} parent=0 // loop_pre_header
    _
  $region3: #{down_pallas.1} parent=0 // loop_header
    %s13 = sphi 0, %s17
    %p14 = scmp.ge.s32.totalorder %s13, 4
    %s23 = sphi 0, %s25
    %s26 = sphi 0, %s23
    %s27 = sphi 0, %s26
    %s43 = sphi 0, %s27
    %s47 = sphi 0, %s47
    %s49 = sphi 0, %s47
    %s50 = sphi 0, %s49
    %s64 = sphi 0, %s50
    %s68 = sphi 0, %s68
    %s70 = sphi 0, %s68
    %s71 = sphi 0, %s70
    %s85 = sphi 0, %s71
    %s89 = sphi 0, %s89
    %s91 = sphi 0, %s89
    %s92 = sphi 0, %s91
    %s106 = sphi 0, %s92
    %s110 = sphi 0, %s110
    %s112 = sphi 0, %s110
    %s113 = sphi 0, %s112
    %s127 = sphi 0, %s113
    %s131 = sphi 0, %s131
    %s133 = sphi 0, %s131
    %s134 = sphi 0, %s133
    %s148 = sphi 0, %s134
    %s152 = sphi 0, %s152
    %s154 = sphi 0, %s152
    %s155 = sphi 0, %s154
    %s169 = sphi 0, %s155
    %s175 = sphi 0, %s177
    %s178 = sphi 0, %s175
    %s179 = sphi 0, %s178
    %s195 = sphi 0, %s179
  $region4: #{down_pallas.1} parent=0 // loop_header_branch
    %16 = sbr.rel (%p14) target = $region8
  $region5: #{down_pallas.1} parent=0 // loop_body
    %s18 = ssub.s32 %s13, 1
    %s19 = ssub.s32 %s13, 2
    %s20 = sadd.s32 %s13, 1
    %s21 = ssub.s32 %s13, %s20
    %p22 = scmp.eq.s32.totalorder %s21, 0
    %s24 = sadd.s32 %s23, 1
    %s25 = scalar_select %p22, %s23, %s24
    %p28 = pneg %p22
    %p29 = scmp.eq.s32.totalorder %s13, 1
    %p30 = por %p28, %p29
    %p31 = scmp.ne.s32.totalorder %s23, %s26
    %p32 = scmp.eq.s32.totalorder %s13, 0
    %p33 = por %p31, %p32
    %p34 = scmp.ne.s32.totalorder %s23, %s26
    %p35 = scmp.eq.s32.totalorder %s18, 1
    %p36 = por %p34, %p35
    %p37 = scmp.ne.s32.totalorder %s26, %s27
    %p38 = scmp.eq.s32.totalorder %s18, 0
    %p39 = por %p37, %p38
    %p40 = scmp.ne.s32.totalorder %s26, %s27
    %p41 = scmp.eq.s32.totalorder %s19, 1
    %p42 = por %p40, %p41
    %p44 = scmp.ne.s32.totalorder %s27, %s43
    %p45 = scmp.eq.s32.totalorder %s19, 0
    %p46 = por %p44, %p45
    %s48 = sadd.s32 %s47, 1
    %p51 = scmp.eq.s32.totalorder %s13, 1
    %p52 = scmp.ne.s32.totalorder %s47, %s49
    %p53 = scmp.eq.s32.totalorder %s13, 0
    %p54 = por %p52, %p53
    %p55 = scmp.ne.s32.totalorder %s47, %s49
    %p56 = scmp.eq.s32.totalorder %s18, 1
    %p57 = por %p55, %p56
    %p58 = scmp.ne.s32.totalorder %s49, %s50
    %p59 = scmp.eq.s32.totalorder %s18, 0
    %p60 = por %p58, %p59
    %p61 = scmp.ne.s32.totalorder %s49, %s50
    %p62 = scmp.eq.s32.totalorder %s19, 1
    %p63 = por %p61, %p62
    %p65 = scmp.ne.s32.totalorder %s50, %s64
    %p66 = scmp.eq.s32.totalorder %s19, 0
    %p67 = por %p65, %p66
    %s69 = sadd.s32 %s68, 1
    %p72 = scmp.eq.s32.totalorder %s13, 1
    %p73 = scmp.ne.s32.totalorder %s68, %s70
    %p74 = scmp.eq.s32.totalorder %s13, 0
    %p75 = por %p73, %p74
    %p76 = scmp.ne.s32.totalorder %s68, %s70
    %p77 = scmp.eq.s32.totalorder %s18, 1
    %p78 = por %p76, %p77
    %p79 = scmp.ne.s32.totalorder %s70, %s71
    %p80 = scmp.eq.s32.totalorder %s18, 0
    %p81 = por %p79, %p80
    %p82 = scmp.ne.s32.totalorder %s70, %s71
    %p83 = scmp.eq.s32.totalorder %s19, 1
    %p84 = por %p82, %p83
    %p86 = scmp.ne.s32.totalorder %s71, %s85
    %p87 = scmp.eq.s32.totalorder %s19, 0
    %p88 = por %p86, %p87
    %s90 = sadd.s32 %s89, 1
    %p93 = scmp.eq.s32.totalorder %s13, 1
    %p94 = scmp.ne.s32.totalorder %s89, %s91
    %p95 = scmp.eq.s32.totalorder %s13, 0
    %p96 = por %p94, %p95
    %p97 = scmp.ne.s32.totalorder %s89, %s91
    %p98 = scmp.eq.s32.totalorder %s18, 1
    %p99 = por %p97, %p98
    %p100 = scmp.ne.s32.totalorder %s91, %s92
    %p101 = scmp.eq.s32.totalorder %s18, 0
    %p102 = por %p100, %p101
    %p103 = scmp.ne.s32.totalorder %s91, %s92
    %p104 = scmp.eq.s32.totalorder %s19, 1
    %p105 = por %p103, %p104
    %p107 = scmp.ne.s32.totalorder %s92, %s106
    %p108 = scmp.eq.s32.totalorder %s19, 0
    %p109 = por %p107, %p108
    %s111 = sadd.s32 %s110, 1
    %p114 = scmp.eq.s32.totalorder %s13, 1
    %p115 = scmp.ne.s32.totalorder %s110, %s112
    %p116 = scmp.eq.s32.totalorder %s13, 0
    %p117 = por %p115, %p116
    %p118 = scmp.ne.s32.totalorder %s110, %s112
    %p119 = scmp.eq.s32.totalorder %s18, 1
    %p120 = por %p118, %p119
    %p121 = scmp.ne.s32.totalorder %s112, %s113
    %p122 = scmp.eq.s32.totalorder %s18, 0
    %p123 = por %p121, %p122
    %p124 = scmp.ne.s32.totalorder %s112, %s113
    %p125 = scmp.eq.s32.totalorder %s19, 1
    %p126 = por %p124, %p125
    %p128 = scmp.ne.s32.totalorder %s113, %s127
    %p129 = scmp.eq.s32.totalorder %s19, 0
    %p130 = por %p128, %p129
    %s132 = sadd.s32 %s131, 1
    %p135 = scmp.eq.s32.totalorder %s13, 1
    %p136 = scmp.ne.s32.totalorder %s131, %s133
    %p137 = scmp.eq.s32.totalorder %s13, 0
    %p138 = por %p136, %p137
    %p139 = scmp.ne.s32.totalorder %s131, %s133
    %p140 = scmp.eq.s32.totalorder %s18, 1
    %p141 = por %p139, %p140
    %p142 = scmp.ne.s32.totalorder %s133, %s134
    %p143 = scmp.eq.s32.totalorder %s18, 0
    %p144 = por %p142, %p143
    %p145 = scmp.ne.s32.totalorder %s133, %s134
    %p146 = scmp.eq.s32.totalorder %s19, 1
    %p147 = por %p145, %p146
    %p149 = scmp.ne.s32.totalorder %s134, %s148
    %p150 = scmp.eq.s32.totalorder %s19, 0
    %p151 = por %p149, %p150
    %s153 = sadd.s32 %s152, 1
    %p156 = scmp.eq.s32.totalorder %s13, 1
    %p157 = scmp.ne.s32.totalorder %s152, %s154
    %p158 = scmp.eq.s32.totalorder %s13, 0
    %p159 = por %p157, %p158
    %p160 = scmp.ne.s32.totalorder %s152, %s154
    %p161 = scmp.eq.s32.totalorder %s18, 1
    %p162 = por %p160, %p161
    %p163 = scmp.ne.s32.totalorder %s154, %s155
    %p164 = scmp.eq.s32.totalorder %s18, 0
    %p165 = por %p163, %p164
    %p166 = scmp.ne.s32.totalorder %s154, %s155
    %p167 = scmp.eq.s32.totalorder %s19, 1
    %p168 = por %p166, %p167
    %p170 = scmp.ne.s32.totalorder %s155, %s169
    %p171 = scmp.eq.s32.totalorder %s19, 0
    %p172 = por %p170, %p171
    %s173 = ssub.s32 %s13, %s20
    %p174 = scmp.eq.s32.totalorder %s173, 0
    %s176 = sadd.s32 %s175, 1
    %s177 = scalar_select %p174, %s175, %s176
    %p180 = pneg %p174
    %p181 = scmp.eq.s32.totalorder %s13, 1
    %p182 = por %p180, %p181
    %p183 = scmp.ne.s32.totalorder %s175, %s178
    %p184 = scmp.eq.s32.totalorder %s13, 0
    %p185 = por %p183, %p184
    %p186 = scmp.ne.s32.totalorder %s175, %s178
    %p187 = scmp.eq.s32.totalorder %s18, 1
    %p188 = por %p186, %p187
    %p189 = scmp.ne.s32.totalorder %s178, %s179
    %p190 = scmp.eq.s32.totalorder %s18, 0
    %p191 = por %p189, %p190
    %p192 = scmp.ne.s32.totalorder %s178, %s179
    %p193 = scmp.eq.s32.totalorder %s19, 1
    %p194 = por %p192, %p193
    %p196 = scmp.ne.s32.totalorder %s179, %s195
    %p197 = scmp.eq.s32.totalorder %s19, 0
    %p198 = por %p196, %p197
    %p199 = scmp.le.s32.totalorder 1, %s13
    %p200 = scmp.lt.s32.totalorder %s13, 3
    %p201 = pnand %p199, %p200
    %p202 = pneg %p201
    // Predicated region
    $region9: #{down_pallas.1} parent=5 // pred_check
      _
    $region10: #{down_pallas.1} parent=5 // pred_check_branch
      %204 = sbr.rel (%p201) target = $region12
    $region11: #{down_pallas.1} parent=5 // pred_region
      %s205 = ssub.s32 %s13, 1
      // Predicated region
      $region13: #{down_pallas.1} parent=11 // pred_check
        %p206 = pneg %p60
      $region14: #{down_pallas.1} parent=11 // pred_check_branch
        %208 = sbr.rel (%p206) target = $region16
      $region15: #{down_pallas.1} parent=11 // pred_region
        _
      $region16: #{down_pallas.1} parent=11 // pred_fallthru
        _
      // Predicated region
      $region17: #{down_pallas.1} parent=11 // pred_check
        %p209 = pneg %p81
      $region18: #{down_pallas.1} parent=11 // pred_check_branch
        %211 = sbr.rel (%p209) target = $region20
      $region19: #{down_pallas.1} parent=11 // pred_region
        _
      $region20: #{down_pallas.1} parent=11 // pred_fallthru
        _
      // Predicated region
      $region21: #{down_pallas.1} parent=11 // pred_check
        %p212 = pneg %p102
      $region22: #{down_pallas.1} parent=11 // pred_check_branch
        %214 = sbr.rel (%p212) target = $region24
      $region23: #{down_pallas.1} parent=11 // pred_region
        _
      $region24: #{down_pallas.1} parent=11 // pred_fallthru
        _
      // Predicated region
      $region25: #{down_pallas.1} parent=11 // pred_check
        %p215 = pneg %p123
      $region26: #{down_pallas.1} parent=11 // pred_check_branch
        %217 = sbr.rel (%p215) target = $region28
      $region27: #{down_pallas.1} parent=11 // pred_region
        _
      $region28: #{down_pallas.1} parent=11 // pred_fallthru
        _
      // Predicated region
      $region29: #{down_pallas.1} parent=11 // pred_check
        %p218 = pneg %p144
      $region30: #{down_pallas.1} parent=11 // pred_check_branch
        %220 = sbr.rel (%p218) target = $region32
      $region31: #{down_pallas.1} parent=11 // pred_region
        _
      $region32: #{down_pallas.1} parent=11 // pred_fallthru
        _
      // Predicated region
      $region33: #{down_pallas.1} parent=11 // pred_check
        %p221 = pneg %p165
      $region34: #{down_pallas.1} parent=11 // pred_check_branch
        %223 = sbr.rel (%p221) target = $region36
      $region35: #{down_pallas.1} parent=11 // pred_region
        _
      $region36: #{down_pallas.1} parent=11 // pred_fallthru
        _
    $region12: #{down_pallas.1} parent=5 // pred_fallthru
      _
    %p224 = scmp.lt.s32.totalorder %s13, 2
    // Predicated region
    $region37: #{down_pallas.1} parent=5 // pred_check
      %p225 = pneg %p224
    $region38: #{down_pallas.1} parent=5 // pred_check_branch
      %227 = sbr.rel (%p225) target = $region40
    $region39: #{down_pallas.1} parent=5 // pred_region
      // Predicated region
      $region41: #{down_pallas.1} parent=39 // pred_check
        %p228 = pneg %p33
      $region42: #{down_pallas.1} parent=39 // pred_check_branch
        %230 = sbr.rel (%p228) target = $region44
      $region43: #{down_pallas.1} parent=39 // pred_region
        %p231 = scmp.lt.s32.totalorder %s13, 1
        %s232 = scalar_select %p231, %s13, 1
        %s233 = smul.addr %s232, 8
        %s234 = smul.addr %s233, 8
        %s235 = scalar_lea.vmem %s0, %s234
      $region44: #{down_pallas.1} parent=39 // pred_fallthru
        _
    $region40: #{down_pallas.1} parent=5 // pred_fallthru
      _
    %p236 = scmp.le.s32.totalorder 1, %s13
    %p237 = scmp.lt.s32.totalorder %s13, 3
    %p238 = pnand %p236, %p237
    %p239 = pneg %p238
    // Predicated region
    $region45: #{down_pallas.1} parent=5 // pred_check
      _
    $region46: #{down_pallas.1} parent=5 // pred_check_branch
      %241 = sbr.rel (%p238) target = $region48
    $region47: #{down_pallas.1} parent=5 // pred_region
      %s242 = ssub.s32 %s13, 1
      %p243 = scmp.lt.s32.totalorder %s18, 1
      %s244 = scalar_select %p243, %s18, 1
      %s245 = smul.addr %s244, 8
      %s246 = smul.addr %s245, 8
      %s247 = scalar_lea.vmem %s0, %s246
      %p248 = pneg %p39
      %p249 = pneg %p36
      %p250 = pneg %p60
      %p251 = pneg %p57
      %p252 = pneg %p81
      %p253 = pneg %p78
      %p254 = pneg %p102
      %p255 = pneg %p99
      %p256 = pneg %p123
      %p257 = pneg %p120
      %p258 = pneg %p144
      %p259 = pneg %p141
      %p260 = pneg %p165
      %p261 = pneg %p162
      %p262 = pneg %p191
      %p263 = pneg %p188
      %p264 = scmp.lt.s32.totalorder %s18, 1
      %s265 = scalar_select %p264, %s18, 1
      %s266 = smul.addr %s265, 8
      %s267 = scalar_lea.vmem %s7, %s266
      %p268 = scmp.lt.s32.totalorder %s18, 1
      %s269 = scalar_select %p268, %s18, 1
      %s270 = smul.addr %s269, 8
      %s271 = smul.addr %s270, 8
      %s272 = scalar_lea.vmem %s0, %s271
      %p273 = scmp.lt.s32.totalorder %s18, 1
      %s274 = scalar_select %p273, %s18, 1
      %s275 = smul.addr %s274, 8
      %s276 = scalar_lea.vmem %s7, %s275
      %vm278 = vcmask 31744
      %279 = vst.msk [vmem:[#allocation2] sm:$0xff] %vm278, 0.0
      %vm280 = vcmask 24576
      %281 = vst.msk [vmem:[#allocation2] sm:$0x1] %vm280, 0.0
      %282 = vst.msk [vmem:[#allocation2 + $0x8] sm:$0x1] %vm280, 0.0
      %283 = vst.msk [vmem:[#allocation2 + $0x10] sm:$0x1] %vm280, 0.0
      %284 = vst.msk [vmem:[#allocation2 + $0x18] sm:$0x1] %vm280, 0.0
      %285 = vst.msk [vmem:[#allocation2 + $0x20] sm:$0x1] %vm280, 0.0
      %286 = vst.msk [vmem:[#allocation2 + $0x28] sm:$0x1] %vm280, 0.0
      %287 = vst.msk [vmem:[#allocation2 + $0x30] sm:$0x1] %vm280, 0.0
      %288 = vst.msk [vmem:[#allocation2 + $0x38] sm:$0x1] %vm280, 0.0
      %v289 = vld [vmem:[%s272] sm:$0x7f]
      %v290 = vld [vmem:[%s272 + $0x8] sm:$0x7f]
      %v291 = vld [vmem:[%s272 + $0x10] sm:$0x7f]
      %v292 = vld [vmem:[%s272 + $0x18] sm:$0x7f]
      %v293 = vld [vmem:[%s272 + $0x20] sm:$0x7f]
      %v294 = vld [vmem:[%s272 + $0x28] sm:$0x7f]
      %v295 = vld [vmem:[%s272 + $0x30] sm:$0x7f]
      %s296 = scalar_lea.vmem [#allocation2], 8
      %vm297 = vcmask 30720
      %298 = vst.msk [vmem:[%s296 + $0x1] sm:$0x7f] %vm297, %v289
      %299 = vst.msk [vmem:[%s296 + $0x9] sm:$0x7f] %vm297, %v290
      %300 = vst.msk [vmem:[%s296 + $0x11] sm:$0x7f] %vm297, %v291
      %301 = vst.msk [vmem:[%s296 + $0x19] sm:$0x7f] %vm297, %v292
      %302 = vst.msk [vmem:[%s296 + $0x21] sm:$0x7f] %vm297, %v293
      %303 = vst.msk [vmem:[%s296 + $0x29] sm:$0x7f] %vm297, %v294
      %304 = vst.msk [vmem:[%s296 + $0x31] sm:$0x7f] %vm297, %v295
      %vm305 = vcmask 64544
      %306 = vst.msk [vmem:[#allocation2] sm:$0xff] %vm305, 0.0
      %v307 = vld [vmem:[%s272] sm:$0xff]
      %v308 = vld [vmem:[%s272 + $0x8] sm:$0xff]
      %v309 = vld [vmem:[%s272 + $0x10] sm:$0xff]
      %v310 = vld [vmem:[%s272 + $0x18] sm:$0xff]
      %v311 = vld [vmem:[%s272 + $0x20] sm:$0xff]
      %v312 = vld [vmem:[%s272 + $0x28] sm:$0xff]
      %v313 = vld [vmem:[%s272 + $0x30] sm:$0xff]
      %321 = vrot.lane.b32.xlu0 %v307, 4
      %v322 = vpop.permute.xlu0 %321
      %323 = vrot.lane.b32.xlu0 %v308, 4
      %v324 = vpop.permute.xlu0 %323
      %325 = vrot.lane.b32.xlu0 %v309, 4
      %v326 = vpop.permute.xlu0 %325
      %327 = vrot.lane.b32.xlu0 %v310, 4
      %v328 = vpop.permute.xlu0 %327
      %329 = vrot.lane.b32.xlu0 %v311, 4
      %v330 = vpop.permute.xlu0 %329
      %331 = vrot.lane.b32.xlu0 %v312, 4
      %v332 = vpop.permute.xlu0 %331
      %333 = vrot.lane.b32.xlu0 %v313, 4
      %v334 = vpop.permute.xlu0 %333
      %342 = vst.msk [vmem:[%s296] sm:$0xff] %vm305, %v322
      %343 = vst.msk [vmem:[%s296 + $0x8] sm:$0xff] %vm305, %v324
      %344 = vst.msk [vmem:[%s296 + $0x10] sm:$0xff] %vm305, %v326
      %345 = vst.msk [vmem:[%s296 + $0x18] sm:$0xff] %vm305, %v328
      %346 = vst.msk [vmem:[%s296 + $0x20] sm:$0xff] %vm305, %v330
      %347 = vst.msk [vmem:[%s296 + $0x28] sm:$0xff] %vm305, %v332
      %348 = vst.msk [vmem:[%s296 + $0x30] sm:$0xff] %vm305, %v334
      %vm349 = vcmask 97344
      %350 = vst.msk [vmem:[#allocation2] sm:$0xff] %vm349, 0.0
      %vm351 = vcmask 90176
      %352 = vst.msk [vmem:[#allocation2 + $0x7] sm:$0x1] %vm351, 0.0
      %353 = vst.msk [vmem:[#allocation2 + $0xf] sm:$0x1] %vm351, 0.0
      %354 = vst.msk [vmem:[#allocation2 + $0x17] sm:$0x1] %vm351, 0.0
      %355 = vst.msk [vmem:[#allocation2 + $0x1f] sm:$0x1] %vm351, 0.0
      %356 = vst.msk [vmem:[#allocation2 + $0x27] sm:$0x1] %vm351, 0.0
      %357 = vst.msk [vmem:[#allocation2 + $0x2f] sm:$0x1] %vm351, 0.0
      %358 = vst.msk [vmem:[#allocation2 + $0x37] sm:$0x1] %vm351, 0.0
      %359 = vst.msk [vmem:[#allocation2 + $0x3f] sm:$0x1] %vm351, 0.0
      %v360 = vld [vmem:[%s272 + $0x1] sm:$0x7f]
      %v361 = vld [vmem:[%s272 + $0x9] sm:$0x7f]
      %v362 = vld [vmem:[%s272 + $0x11] sm:$0x7f]
      %v363 = vld [vmem:[%s272 + $0x19] sm:$0x7f]
      %v364 = vld [vmem:[%s272 + $0x21] sm:$0x7f]
      %v365 = vld [vmem:[%s272 + $0x29] sm:$0x7f]
      %v366 = vld [vmem:[%s272 + $0x31] sm:$0x7f]
      %374 = vrot.lane.b32.xlu0 %v360, 8
      %v375 = vpop.permute.xlu0 %374
      %376 = vrot.lane.b32.xlu0 %v361, 8
      %v377 = vpop.permute.xlu0 %376
      %378 = vrot.lane.b32.xlu0 %v362, 8
      %v379 = vpop.permute.xlu0 %378
      %380 = vrot.lane.b32.xlu0 %v363, 8
      %v381 = vpop.permute.xlu0 %380
      %382 = vrot.lane.b32.xlu0 %v364, 8
      %v383 = vpop.permute.xlu0 %382
      %384 = vrot.lane.b32.xlu0 %v365, 8
      %v385 = vpop.permute.xlu0 %384
      %386 = vrot.lane.b32.xlu0 %v366, 8
      %v387 = vpop.permute.xlu0 %386
      %vm395 = vcmask 96320
      %396 = vst.msk [vmem:[%s296] sm:$0x7f] %vm395, %v375
      %397 = vst.msk [vmem:[%s296 + $0x8] sm:$0x7f] %vm395, %v377
      %398 = vst.msk [vmem:[%s296 + $0x10] sm:$0x7f] %vm395, %v379
      %399 = vst.msk [vmem:[%s296 + $0x18] sm:$0x7f] %vm395, %v381
      %400 = vst.msk [vmem:[%s296 + $0x20] sm:$0x7f] %vm395, %v383
      %401 = vst.msk [vmem:[%s296 + $0x28] sm:$0x7f] %vm395, %v385
      %402 = vst.msk [vmem:[%s296 + $0x30] sm:$0x7f] %vm395, %v387
      %vm403 = vcmask 122976
      %404 = vst.msk [vmem:[#allocation2] sm:$0x1] %vm403, 0.0
      %405 = vst.msk [vmem:[#allocation2 + $0x8] sm:$0x1] %vm403, 0.0
      %406 = vst.msk [vmem:[#allocation2 + $0x10] sm:$0x1] %vm403, 0.0
      %407 = vst.msk [vmem:[#allocation2 + $0x18] sm:$0x1] %vm403, 0.0
      %408 = vst.msk [vmem:[#allocation2 + $0x20] sm:$0x1] %vm403, 0.0
      %409 = vst.msk [vmem:[#allocation2 + $0x28] sm:$0x1] %vm403, 0.0
      %410 = vst.msk [vmem:[#allocation2 + $0x30] sm:$0x1] %vm403, 0.0
      %411 = vst.msk [vmem:[#allocation2 + $0x38] sm:$0x1] %vm403, 0.0
      %v412 = vld [vmem:[%s272] sm:$0x7f]
      %v413 = vld [vmem:[%s272 + $0x8] sm:$0x7f]
      %v414 = vld [vmem:[%s272 + $0x10] sm:$0x7f]
      %v415 = vld [vmem:[%s272 + $0x18] sm:$0x7f]
      %v416 = vld [vmem:[%s272 + $0x20] sm:$0x7f]
      %v417 = vld [vmem:[%s272 + $0x28] sm:$0x7f]
      %v418 = vld [vmem:[%s272 + $0x30] sm:$0x7f]
      %v419 = vld [vmem:[%s272 + $0x38] sm:$0x7f]
      %428 = vrot.lane.b32.xlu0 %v412, 12
      %v429 = vpop.permute.xlu0 %428
      %430 = vrot.lane.b32.xlu0 %v413, 12
      %v431 = vpop.permute.xlu0 %430
      %432 = vrot.lane.b32.xlu0 %v414, 12
      %v433 = vpop.permute.xlu0 %432
      %434 = vrot.lane.b32.xlu0 %v415, 12
      %v435 = vpop.permute.xlu0 %434
      %436 = vrot.lane.b32.xlu0 %v416, 12
      %v437 = vpop.permute.xlu0 %436
      %438 = vrot.lane.b32.xlu0 %v417, 12
      %v439 = vpop.permute.xlu0 %438
      %440 = vrot.lane.b32.xlu0 %v418, 12
      %v441 = vpop.permute.xlu0 %440
      %442 = vrot.lane.b32.xlu0 %v419, 12
      %v443 = vpop.permute.xlu0 %442
      %vm452 = vcmask 129120
      %453 = vst.msk [vmem:[#allocation2 + $0x1] sm:$0x7f] %vm452, %v429
      %454 = vst.msk [vmem:[#allocation2 + $0x9] sm:$0x7f] %vm452, %v431
      %455 = vst.msk [vmem:[#allocation2 + $0x11] sm:$0x7f] %vm452, %v433
      %456 = vst.msk [vmem:[#allocation2 + $0x19] sm:$0x7f] %vm452, %v435
      %457 = vst.msk [vmem:[#allocation2 + $0x21] sm:$0x7f] %vm452, %v437
      %458 = vst.msk [vmem:[#allocation2 + $0x29] sm:$0x7f] %vm452, %v439
      %459 = vst.msk [vmem:[#allocation2 + $0x31] sm:$0x7f] %vm452, %v441
      %460 = vst.msk [vmem:[#allocation2 + $0x39] sm:$0x7f] %vm452, %v443
      %v461 = vld [vmem:[%s272] sm:$0xff]
      %v462 = vld [vmem:[%s272 + $0x8] sm:$0xff]
      %v463 = vld [vmem:[%s272 + $0x10] sm:$0xff]
      %v464 = vld [vmem:[%s272 + $0x18] sm:$0xff]
      %v465 = vld [vmem:[%s272 + $0x20] sm:$0xff]
      %v466 = vld [vmem:[%s272 + $0x28] sm:$0xff]
      %v467 = vld [vmem:[%s272 + $0x30] sm:$0xff]
      %v468 = vld [vmem:[%s272 + $0x38] sm:$0xff]
      %477 = vrot.lane.b32.xlu0 %v461, 16
      %v478 = vpop.permute.xlu0 %477
      %479 = vrot.lane.b32.xlu0 %v462, 16
      %v480 = vpop.permute.xlu0 %479
      %481 = vrot.lane.b32.xlu0 %v463, 16
      %v482 = vpop.permute.xlu0 %481
      %483 = vrot.lane.b32.xlu0 %v464, 16
      %v484 = vpop.permute.xlu0 %483
      %485 = vrot.lane.b32.xlu0 %v465, 16
      %v486 = vpop.permute.xlu0 %485
      %487 = vrot.lane.b32.xlu0 %v466, 16
      %v488 = vpop.permute.xlu0 %487
      %489 = vrot.lane.b32.xlu0 %v467, 16
      %v490 = vpop.permute.xlu0 %489
      %491 = vrot.lane.b32.xlu0 %v468, 16
      %v492 = vpop.permute.xlu0 %491
      %vm501 = vcmask 162944
      %502 = vst.msk [vmem:[#allocation2] sm:$0xff] %vm501, %v478
      %503 = vst.msk [vmem:[#allocation2 + $0x8] sm:$0xff] %vm501, %v480
      %504 = vst.msk [vmem:[#allocation2 + $0x10] sm:$0xff] %vm501, %v482
      %505 = vst.msk [vmem:[#allocation2 + $0x18] sm:$0xff] %vm501, %v484
      %506 = vst.msk [vmem:[#allocation2 + $0x20] sm:$0xff] %vm501, %v486
      %507 = vst.msk [vmem:[#allocation2 + $0x28] sm:$0xff] %vm501, %v488
      %508 = vst.msk [vmem:[#allocation2 + $0x30] sm:$0xff] %vm501, %v490
      %509 = vst.msk [vmem:[#allocation2 + $0x38] sm:$0xff] %vm501, %v492
      %vm510 = vcmask 188576
      %511 = vst.msk [vmem:[#allocation2 + $0x7] sm:$0x1] %vm510, 0.0
      %512 = vst.msk [vmem:[#allocation2 + $0xf] sm:$0x1] %vm510, 0.0
      %513 = vst.msk [vmem:[#allocation2 + $0x17] sm:$0x1] %vm510, 0.0
      %514 = vst.msk [vmem:[#allocation2 + $0x1f] sm:$0x1] %vm510, 0.0
      %515 = vst.msk [vmem:[#allocation2 + $0x27] sm:$0x1] %vm510, 0.0
      %516 = vst.msk [vmem:[#allocation2 + $0x2f] sm:$0x1] %vm510, 0.0
      %517 = vst.msk [vmem:[#allocation2 + $0x37] sm:$0x1] %vm510, 0.0
      %518 = vst.msk [vmem:[#allocation2 + $0x3f] sm:$0x1] %vm510, 0.0
      %v519 = vld [vmem:[%s272 + $0x1] sm:$0x7f]
      %v520 = vld [vmem:[%s272 + $0x9] sm:$0x7f]
      %v521 = vld [vmem:[%s272 + $0x11] sm:$0x7f]
      %v522 = vld [vmem:[%s272 + $0x19] sm:$0x7f]
      %v523 = vld [vmem:[%s272 + $0x21] sm:$0x7f]
      %v524 = vld [vmem:[%s272 + $0x29] sm:$0x7f]
      %v525 = vld [vmem:[%s272 + $0x31] sm:$0x7f]
      %v526 = vld [vmem:[%s272 + $0x39] sm:$0x7f]
      %535 = vrot.lane.b32.xlu0 %v519, 20
      %v536 = vpop.permute.xlu0 %535
      %537 = vrot.lane.b32.xlu0 %v520, 20
      %v538 = vpop.permute.xlu0 %537
      %539 = vrot.lane.b32.xlu0 %v521, 20
      %v540 = vpop.permute.xlu0 %539
      %541 = vrot.lane.b32.xlu0 %v522, 20
      %v542 = vpop.permute.xlu0 %541
      %543 = vrot.lane.b32.xlu0 %v523, 20
      %v544 = vpop.permute.xlu0 %543
      %545 = vrot.lane.b32.xlu0 %v524, 20
      %v546 = vpop.permute.xlu0 %545
      %547 = vrot.lane.b32.xlu0 %v525, 20
      %v548 = vpop.permute.xlu0 %547
      %549 = vrot.lane.b32.xlu0 %v526, 20
      %v550 = vpop.permute.xlu0 %549
      %vm559 = vcmask 194720
      %560 = vst.msk [vmem:[#allocation2] sm:$0x7f] %vm559, %v536
      %561 = vst.msk [vmem:[#allocation2 + $0x8] sm:$0x7f] %vm559, %v538
      %562 = vst.msk [vmem:[#allocation2 + $0x10] sm:$0x7f] %vm559, %v540
      %563 = vst.msk [vmem:[#allocation2 + $0x18] sm:$0x7f] %vm559, %v542
      %564 = vst.msk [vmem:[#allocation2 + $0x20] sm:$0x7f] %vm559, %v544
      %565 = vst.msk [vmem:[#allocation2 + $0x28] sm:$0x7f] %vm559, %v546
      %566 = vst.msk [vmem:[#allocation2 + $0x30] sm:$0x7f] %vm559, %v548
      %567 = vst.msk [vmem:[#allocation2 + $0x38] sm:$0x7f] %vm559, %v550
      %s568 = scalar_lea.vmem [#allocation2], 56
      %vm569 = vcmask 228544
      %570 = vst.msk [vmem:[%s568] sm:$0xff] %vm569, 0.0
      %vm571 = vcmask 221376
      %572 = vst.msk [vmem:[#allocation2] sm:$0x1] %vm571, 0.0
      %573 = vst.msk [vmem:[#allocation2 + $0x8] sm:$0x1] %vm571, 0.0
      %574 = vst.msk [vmem:[#allocation2 + $0x10] sm:$0x1] %vm571, 0.0
      %575 = vst.msk [vmem:[#allocation2 + $0x18] sm:$0x1] %vm571, 0.0
      %576 = vst.msk [vmem:[#allocation2 + $0x20] sm:$0x1] %vm571, 0.0
      %577 = vst.msk [vmem:[#allocation2 + $0x28] sm:$0x1] %vm571, 0.0
      %578 = vst.msk [vmem:[#allocation2 + $0x30] sm:$0x1] %vm571, 0.0
      %579 = vst.msk [vmem:[#allocation2 + $0x38] sm:$0x1] %vm571, 0.0
      %s580 = scalar_lea.vmem %s272, 8
      %v581 = vld [vmem:[%s580] sm:$0x7f]
      %v582 = vld [vmem:[%s580 + $0x8] sm:$0x7f]
      %v583 = vld [vmem:[%s580 + $0x10] sm:$0x7f]
      %v584 = vld [vmem:[%s580 + $0x18] sm:$0x7f]
      %v585 = vld [vmem:[%s580 + $0x20] sm:$0x7f]
      %v586 = vld [vmem:[%s580 + $0x28] sm:$0x7f]
      %v587 = vld [vmem:[%s580 + $0x30] sm:$0x7f]
      %595 = vrot.lane.b32.xlu0 %v581, 24
      %v596 = vpop.permute.xlu0 %595
      %597 = vrot.lane.b32.xlu0 %v582, 24
      %v598 = vpop.permute.xlu0 %597
      %599 = vrot.lane.b32.xlu0 %v583, 24
      %v600 = vpop.permute.xlu0 %599
      %601 = vrot.lane.b32.xlu0 %v584, 24
      %v602 = vpop.permute.xlu0 %601
      %603 = vrot.lane.b32.xlu0 %v585, 24
      %v604 = vpop.permute.xlu0 %603
      %605 = vrot.lane.b32.xlu0 %v586, 24
      %v606 = vpop.permute.xlu0 %605
      %607 = vrot.lane.b32.xlu0 %v587, 24
      %v608 = vpop.permute.xlu0 %607
      %vm616 = vcmask 227520
      %617 = vst.msk [vmem:[#allocation2 + $0x1] sm:$0x7f] %vm616, %v596
      %618 = vst.msk [vmem:[#allocation2 + $0x9] sm:$0x7f] %vm616, %v598
      %619 = vst.msk [vmem:[#allocation2 + $0x11] sm:$0x7f] %vm616, %v600
      %620 = vst.msk [vmem:[#allocation2 + $0x19] sm:$0x7f] %vm616, %v602
      %621 = vst.msk [vmem:[#allocation2 + $0x21] sm:$0x7f] %vm616, %v604
      %622 = vst.msk [vmem:[#allocation2 + $0x29] sm:$0x7f] %vm616, %v606
      %623 = vst.msk [vmem:[#allocation2 + $0x31] sm:$0x7f] %vm616, %v608
      %vm624 = vcmask 261344
      %625 = vst.msk [vmem:[%s568] sm:$0xff] %vm624, 0.0
      %v626 = vld [vmem:[%s580] sm:$0xff]
      %v627 = vld [vmem:[%s580 + $0x8] sm:$0xff]
      %v628 = vld [vmem:[%s580 + $0x10] sm:$0xff]
      %v629 = vld [vmem:[%s580 + $0x18] sm:$0xff]
      %v630 = vld [vmem:[%s580 + $0x20] sm:$0xff]
      %v631 = vld [vmem:[%s580 + $0x28] sm:$0xff]
      %v632 = vld [vmem:[%s580 + $0x30] sm:$0xff]
      %640 = vrot.lane.b32.xlu0 %v626, 28
      %v641 = vpop.permute.xlu0 %640
      %642 = vrot.lane.b32.xlu0 %v627, 28
      %v643 = vpop.permute.xlu0 %642
      %644 = vrot.lane.b32.xlu0 %v628, 28
      %v645 = vpop.permute.xlu0 %644
      %646 = vrot.lane.b32.xlu0 %v629, 28
      %v647 = vpop.permute.xlu0 %646
      %648 = vrot.lane.b32.xlu0 %v630, 28
      %v649 = vpop.permute.xlu0 %648
      %650 = vrot.lane.b32.xlu0 %v631, 28
      %v651 = vpop.permute.xlu0 %650
      %652 = vrot.lane.b32.xlu0 %v632, 28
      %v653 = vpop.permute.xlu0 %652
      %661 = vst.msk [vmem:[#allocation2] sm:$0xff] %vm624, %v641
      %662 = vst.msk [vmem:[#allocation2 + $0x8] sm:$0xff] %vm624, %v643
      %663 = vst.msk [vmem:[#allocation2 + $0x10] sm:$0xff] %vm624, %v645
      %664 = vst.msk [vmem:[#allocation2 + $0x18] sm:$0xff] %vm624, %v647
      %665 = vst.msk [vmem:[#allocation2 + $0x20] sm:$0xff] %vm624, %v649
      %666 = vst.msk [vmem:[#allocation2 + $0x28] sm:$0xff] %vm624, %v651
      %667 = vst.msk [vmem:[#allocation2 + $0x30] sm:$0xff] %vm624, %v653
      %vm668 = vcmask 294144
      %669 = vst.msk [vmem:[%s568] sm:$0xff] %vm668, 0.0
      %vm670 = vcmask 286976
      %671 = vst.msk [vmem:[#allocation2 + $0x7] sm:$0x1] %vm670, 0.0
      %672 = vst.msk [vmem:[#allocation2 + $0xf] sm:$0x1] %vm670, 0.0
      %673 = vst.msk [vmem:[#allocation2 + $0x17] sm:$0x1] %vm670, 0.0
      %674 = vst.msk [vmem:[#allocation2 + $0x1f] sm:$0x1] %vm670, 0.0
      %675 = vst.msk [vmem:[#allocation2 + $0x27] sm:$0x1] %vm670, 0.0
      %676 = vst.msk [vmem:[#allocation2 + $0x2f] sm:$0x1] %vm670, 0.0
      %677 = vst.msk [vmem:[#allocation2 + $0x37] sm:$0x1] %vm670, 0.0
      %678 = vst.msk [vmem:[#allocation2 + $0x3f] sm:$0x1] %vm670, 0.0
      %v679 = vld [vmem:[%s580 + $0x1] sm:$0x7f]
      %v680 = vld [vmem:[%s580 + $0x9] sm:$0x7f]
      %v681 = vld [vmem:[%s580 + $0x11] sm:$0x7f]
      %v682 = vld [vmem:[%s580 + $0x19] sm:$0x7f]
      %v683 = vld [vmem:[%s580 + $0x21] sm:$0x7f]
      %v684 = vld [vmem:[%s580 + $0x29] sm:$0x7f]
      %v685 = vld [vmem:[%s580 + $0x31] sm:$0x7f]
      %693 = vrot.lane.b32.xlu0 %v679, 32
      %v694 = vpop.permute.xlu0 %693
      %695 = vrot.lane.b32.xlu0 %v680, 32
      %v696 = vpop.permute.xlu0 %695
      %697 = vrot.lane.b32.xlu0 %v681, 32
      %v698 = vpop.permute.xlu0 %697
      %699 = vrot.lane.b32.xlu0 %v682, 32
      %v700 = vpop.permute.xlu0 %699
      %701 = vrot.lane.b32.xlu0 %v683, 32
      %v702 = vpop.permute.xlu0 %701
      %703 = vrot.lane.b32.xlu0 %v684, 32
      %v704 = vpop.permute.xlu0 %703
      %705 = vrot.lane.b32.xlu0 %v685, 32
      %v706 = vpop.permute.xlu0 %705
      %vm714 = vcmask 293120
      %715 = vst.msk [vmem:[#allocation2] sm:$0x7f] %vm714, %v694
      %716 = vst.msk [vmem:[#allocation2 + $0x8] sm:$0x7f] %vm714, %v696
      %717 = vst.msk [vmem:[#allocation2 + $0x10] sm:$0x7f] %vm714, %v698
      %718 = vst.msk [vmem:[#allocation2 + $0x18] sm:$0x7f] %vm714, %v700
      %719 = vst.msk [vmem:[#allocation2 + $0x20] sm:$0x7f] %vm714, %v702
      %720 = vst.msk [vmem:[#allocation2 + $0x28] sm:$0x7f] %vm714, %v704
      %721 = vst.msk [vmem:[#allocation2 + $0x30] sm:$0x7f] %vm714, %v706
      %v722 = vld [vmem:[#allocation2] sm:$0xff]
      %v723 = vld [vmem:[#allocation2 + $0x8] sm:$0xff]
      %v724 = vld [vmem:[#allocation2 + $0x10] sm:$0xff]
      %v725 = vld [vmem:[#allocation2 + $0x18] sm:$0xff]
      %v726 = vld [vmem:[#allocation2 + $0x20] sm:$0xff]
      %v727 = vld [vmem:[#allocation2 + $0x28] sm:$0xff]
      %v728 = vld [vmem:[#allocation2 + $0x30] sm:$0xff]
      %v729 = vld [vmem:[#allocation2 + $0x38] sm:$0xff]
      %v730 = vpack.c.bf16 %v723, %v722
      %v731 = vpack.c.bf16 %v725, %v724
      %v732 = vpack.c.bf16 %v727, %v726
      %v733 = vpack.c.bf16 %v729, %v728
      %v734 = vld [vmem:[%s1] sm:$0xf]
      %v735 = vld [vmem:[%s1 + $0x4] sm:$0xf]
      %v736 = vld [vmem:[%s1 + $0x8] sm:$0xf]
      %v737 = vld [vmem:[%s1 + $0xc] sm:$0xf]
      %v738 = vld [vmem:[%s1 + $0x10] sm:$0x3]
      %v744 = vunpack.c.l.b16 %v734
      %v745 = vunpack.c.l.b16 %v735
      %v746 = vunpack.c.l.b16 %v736
      %v747 = vunpack.c.l.b16 %v737
      %v748 = vunpack.c.l.b16 %v738
      %v749 = vpack.c.b16 %v745, %v744
      %v750 = vpack.c.b16 %v747, %v746
      %v751 = vpack.c.b16 %v748, %v748
      %vm754 = vcmask 293888
      %v756 = vsel %vm754, %v730, 0
      %v759 = vsel %vm754, %v731, 0
      %v762 = vsel %vm754, %v732, 0
      %v765 = vsel %vm754, %v733, 0
      %vm767 = vcmask 1041408
      %v769 = vsel %vm767, %v751, 0
      %771 = vmatprep.subr.bf16.mxu0 0
      %772 = vmatpush1.bf16.msra.mxu0 0
      %773 = vmatprep.subr.bf16.mxu0 0
      %774 = vmatpush1.bf16.msra.mxu0 0
      %775 = vmatprep.subr.bf16.mxu0 0
      %776 = vmatpush1.bf16.msra.mxu0 0
      %777 = vmatprep.subr.bf16.mxu0 0
      %778 = vmatpush1.bf16.msra.mxu0 0
      %779 = vmatprep.subr.bf16.mxu0 0
      %780 = vmatpush1.bf16.msra.mxu0 0
      %781 = vmatprep.subr.bf16.mxu0 0
      %782 = vmatpush1.bf16.msra.mxu0 %v769
      %783 = vmatprep.subr.bf16.mxu0 0
      %784 = vmatpush1.bf16.msra.mxu0 %v750
      %785 = vmatprep.subr.bf16.mxu0 0
      %786 = vmatpush1.bf16.msra.mxu0 %v749
      %787 = vmatprep.subr.bf16.mxu0 0
      %788 = vmatpush2.bf16.msra.mxu0 0
      %789 = vmatprep.subr.bf16.mxu0 0
      %790 = vmatpush2.bf16.msra.mxu0 0
      %791 = vmatprep.subr.bf16.mxu0 0
      %792 = vmatpush2.bf16.msra.mxu0 0
      %793 = vmatprep.subr.bf16.mxu0 0
      %794 = vmatpush2.bf16.msra.mxu0 0
      %795 = vmatprep.subr.bf16.mxu0 0
      %796 = vmatpush2.bf16.msra.mxu0 0
      %797 = vmatprep.subr.bf16.mxu0 0
      %798 = vmatpush2.bf16.msra.mxu0 0
      %799 = vmatprep.subr.bf16.mxu0 0
      %800 = vmatpush2.bf16.msra.mxu0 0
      %801 = vmatprep.subr.bf16.mxu0 0
      %802 = vmatpush2.bf16.msra.mxu0 0
      %803 = vmatprep.mubr.bf16.mxu0 0
      %804 = vmatmul.mubr.bf16.gmra.mxu0 %v756
      %v805 = vpop.f32.mrf.mxu0
      %v806 = vadd.f32 0.0, %v805
      %v807 = vpop.f32.mrf.mxu0
      %v808 = vpop.f32.mrf.mxu0
      %v809 = vadd.f32 0.0, %v808
      %v810 = vpop.f32.mrf.mxu0
      %811 = vmatprep.mubr.bf16.mxu0 0
      %812 = vmatmul.mubr.bf16.gmra.mxu0 %v759
      %v813 = vpop.f32.mrf.mxu0
      %v814 = vadd.f32 0.0, %v813
      %v815 = vpop.f32.mrf.mxu0
      %v816 = vpop.f32.mrf.mxu0
      %v817 = vadd.f32 0.0, %v816
      %v818 = vpop.f32.mrf.mxu0
      %819 = vmatprep.mubr.bf16.mxu0 0
      %820 = vmatmul.mubr.bf16.gmra.mxu0 %v762
      %v821 = vpop.f32.mrf.mxu0
      %v822 = vadd.f32 0.0, %v821
      %v823 = vpop.f32.mrf.mxu0
      %v824 = vpop.f32.mrf.mxu0
      %v825 = vadd.f32 0.0, %v824
      %v826 = vpop.f32.mrf.mxu0
      %827 = vmatprep.mubr.bf16.mxu0 0
      %828 = vmatmul.mubr.bf16.gmra.mxu0 %v765
      %v829 = vpop.f32.mrf.mxu0
      %v830 = vadd.f32 0.0, %v829
      %v831 = vpop.f32.mrf.mxu0
      %v832 = vpop.f32.mrf.mxu0
      %v833 = vadd.f32 0.0, %v832
      %v834 = vpop.f32.mrf.mxu0
      %835 = vdwg.mxu0
      %v836 = vld [vmem:[%s2] sm:$0x1]
      %v838 = vlaneseq
      %v839 = vshrl.u32 %v838, 7
      %v840 = vsub.s32 0, %v839
      %v841 = vrot.slane %v836, %v840
      %v843 = vmul.f32 %v806, %v841
      %v844 = vmul.f32 %v809, %v841
      %v845 = vmul.f32 %v814, %v841
      %v846 = vmul.f32 %v817, %v841
      %v847 = vmul.f32 %v822, %v841
      %v848 = vmul.f32 %v825, %v841
      %v849 = vmul.f32 %v830, %v841
      %v850 = vmul.f32 %v833, %v841
      %v851 = vld [vmem:[%s3] sm:$0x1]
      %v853 = vlaneseq
      %v854 = vshrl.u32 %v853, 7
      %v855 = vsub.s32 0, %v854
      %v856 = vrot.slane %v851, %v855
      %v858 = vadd.f32 %v843, %v856
      %v859 = vadd.f32 %v844, %v856
      %v860 = vadd.f32 %v845, %v856
      %v861 = vadd.f32 %v846, %v856
      %v862 = vadd.f32 %v847, %v856
      %v863 = vadd.f32 %v848, %v856
      %v864 = vadd.f32 %v849, %v856
      %v865 = vadd.f32 %v850, %v856
      %v866 = vmul.f32 %v858, 0.5
      %v867 = vmul.f32 %v859, 0.5
      %v868 = vmul.f32 %v860, 0.5
      %v869 = vmul.f32 %v861, 0.5
      %v870 = vmul.f32 %v862, 0.5
      %v871 = vmul.f32 %v863, 0.5
      %v872 = vmul.f32 %v864, 0.5
      %v873 = vmul.f32 %v865, 0.5
      %v874 = vmul.f32 %v858, 0.70710677
      %v875 = vmul.f32 %v859, 0.70710677
      %v876 = vmul.f32 %v860, 0.70710677
      %v877 = vmul.f32 %v861, 0.70710677
      %v878 = vmul.f32 %v862, 0.70710677
      %v879 = vmul.f32 %v863, 0.70710677
      %v880 = vmul.f32 %v864, 0.70710677
      %v881 = vmul.f32 %v865, 0.70710677
      %v882 = verf.f32.pop %v874
      %v883 = verf.f32.pop %v875
      %v884 = verf.f32.pop %v876
      %v885 = verf.f32.pop %v877
      %v886 = verf.f32.pop %v878
      %v887 = verf.f32.pop %v879
      %v888 = verf.f32.pop %v880
      %v889 = verf.f32.pop %v881
      %v890 = vadd.f32 %v882, 1.0
      %v891 = vadd.f32 %v883, 1.0
      %v892 = vadd.f32 %v884, 1.0
      %v893 = vadd.f32 %v885, 1.0
      %v894 = vadd.f32 %v886, 1.0
      %v895 = vadd.f32 %v887, 1.0
      %v896 = vadd.f32 %v888, 1.0
      %v897 = vadd.f32 %v889, 1.0
      %v898 = vmul.f32 %v866, %v890
      %v899 = vmul.f32 %v867, %v891
      %v900 = vmul.f32 %v868, %v892
      %v901 = vmul.f32 %v869, %v893
      %v902 = vmul.f32 %v870, %v894
      %v903 = vmul.f32 %v871, %v895
      %v904 = vmul.f32 %v872, %v896
      %v905 = vmul.f32 %v873, %v897
      %vm906 = vcmask 64512
      %907 = vst.msk [vmem:[#allocation3] sm:$0xff] %vm906, 0.0
      %vm908 = vcmask 57344
      %909 = vst.msk [vmem:[#allocation3] sm:$0x1] %vm908, 0.0
      %910 = vst.msk [vmem:[#allocation3 + $0x8] sm:$0x1] %vm908, 0.0
      %911 = vst.msk [vmem:[#allocation3 + $0x10] sm:$0x1] %vm908, 0.0
      %912 = vst.msk [vmem:[#allocation3 + $0x18] sm:$0x1] %vm908, 0.0
      %913 = vst.msk [vmem:[#allocation3 + $0x20] sm:$0x1] %vm908, 0.0
      %914 = vst.msk [vmem:[#allocation3 + $0x28] sm:$0x1] %vm908, 0.0
      %915 = vst.msk [vmem:[#allocation3 + $0x30] sm:$0x1] %vm908, 0.0
      %916 = vst.msk [vmem:[#allocation3 + $0x38] sm:$0x1] %vm908, 0.0
      %s917 = scalar_lea.vmem [#allocation3], 8
      %vm918 = vcmask 63488
      %919 = vst.msk [vmem:[%s917 + $0x1] sm:$0x7f] %vm918, %v898
      %920 = vst.msk [vmem:[%s917 + $0x9] sm:$0x7f] %vm918, %v899
      %921 = vst.msk [vmem:[%s917 + $0x11] sm:$0x7f] %vm918, %v900
      %922 = vst.msk [vmem:[%s917 + $0x19] sm:$0x7f] %vm918, %v901
      %923 = vst.msk [vmem:[%s917 + $0x21] sm:$0x7f] %vm918, %v902
      %924 = vst.msk [vmem:[%s917 + $0x29] sm:$0x7f] %vm918, %v903
      %925 = vst.msk [vmem:[%s917 + $0x31] sm:$0x7f] %vm918, %v904
      %vm926 = vcmask 130112
      %927 = vst.msk [vmem:[#allocation3] sm:$0xff] %vm926, 0.0
      %935 = vrot.lane.b32.xlu0 %v898, 8
      %v936 = vpop.permute.xlu0 %935
      %937 = vrot.lane.b32.xlu0 %v899, 8
      %v938 = vpop.permute.xlu0 %937
      %939 = vrot.lane.b32.xlu0 %v900, 8
      %v940 = vpop.permute.xlu0 %939
      %941 = vrot.lane.b32.xlu0 %v901, 8
      %v942 = vpop.permute.xlu0 %941
      %943 = vrot.lane.b32.xlu0 %v902, 8
      %v944 = vpop.permute.xlu0 %943
      %945 = vrot.lane.b32.xlu0 %v903, 8
      %v946 = vpop.permute.xlu0 %945
      %947 = vrot.lane.b32.xlu0 %v904, 8
      %v948 = vpop.permute.xlu0 %947
      %956 = vst.msk [vmem:[%s917] sm:$0xff] %vm926, %v936
      %957 = vst.msk [vmem:[%s917 + $0x8] sm:$0xff] %vm926, %v938
      %958 = vst.msk [vmem:[%s917 + $0x10] sm:$0xff] %vm926, %v940
      %959 = vst.msk [vmem:[%s917 + $0x18] sm:$0xff] %vm926, %v942
      %960 = vst.msk [vmem:[%s917 + $0x20] sm:$0xff] %vm926, %v944
      %961 = vst.msk [vmem:[%s917 + $0x28] sm:$0xff] %vm926, %v946
      %962 = vst.msk [vmem:[%s917 + $0x30] sm:$0xff] %vm926, %v948
      %vm963 = vcmask 195712
      %964 = vst.msk [vmem:[#allocation3] sm:$0xff] %vm963, 0.0
      %vm965 = vcmask 188544
      %966 = vst.msk [vmem:[#allocation3 + $0x7] sm:$0x1] %vm965, 0.0
      %967 = vst.msk [vmem:[#allocation3 + $0xf] sm:$0x1] %vm965, 0.0
      %968 = vst.msk [vmem:[#allocation3 + $0x17] sm:$0x1] %vm965, 0.0
      %969 = vst.msk [vmem:[#allocation3 + $0x1f] sm:$0x1] %vm965, 0.0
      %970 = vst.msk [vmem:[#allocation3 + $0x27] sm:$0x1] %vm965, 0.0
      %971 = vst.msk [vmem:[#allocation3 + $0x2f] sm:$0x1] %vm965, 0.0
      %972 = vst.msk [vmem:[#allocation3 + $0x37] sm:$0x1] %vm965, 0.0
      %973 = vst.msk [vmem:[#allocation3 + $0x3f] sm:$0x1] %vm965, 0.0
      %974 = vrot.lane.b32.xlu0 %v898, 16
      %v975 = vpop.permute.xlu0 %974
      %976 = vrot.lane.b32.xlu0 %v899, 16
      %v977 = vpop.permute.xlu0 %976
      %978 = vrot.lane.b32.xlu0 %v900, 16
      %v979 = vpop.permute.xlu0 %978
      %980 = vrot.lane.b32.xlu0 %v901, 16
      %v981 = vpop.permute.xlu0 %980
      %982 = vrot.lane.b32.xlu0 %v902, 16
      %v983 = vpop.permute.xlu0 %982
      %984 = vrot.lane.b32.xlu0 %v903, 16
      %v985 = vpop.permute.xlu0 %984
      %986 = vrot.lane.b32.xlu0 %v904, 16
      %v987 = vpop.permute.xlu0 %986
      %vm995 = vcmask 195713
      %996 = vst.msk [vmem:[%s917 - $0x1] sm:$0xfe] %vm995, %v975
      %997 = vst.msk [vmem:[%s917 + $0x7] sm:$0xfe] %vm995, %v977
      %998 = vst.msk [vmem:[%s917 + $0xf] sm:$0xfe] %vm995, %v979
      %999 = vst.msk [vmem:[%s917 + $0x17] sm:$0xfe] %vm995, %v981
      %1000 = vst.msk [vmem:[%s917 + $0x1f] sm:$0xfe] %vm995, %v983
      %1001 = vst.msk [vmem:[%s917 + $0x27] sm:$0xfe] %vm995, %v985
      %1002 = vst.msk [vmem:[%s917 + $0x2f] sm:$0xfe] %vm995, %v987
      %vm1003 = vcmask 254144
      %1004 = vst.msk [vmem:[#allocation3] sm:$0x1] %vm1003, 0.0
      %1005 = vst.msk [vmem:[#allocation3 + $0x8] sm:$0x1] %vm1003, 0.0
      %1006 = vst.msk [vmem:[#allocation3 + $0x10] sm:$0x1] %vm1003, 0.0
      %1007 = vst.msk [vmem:[#allocation3 + $0x18] sm:$0x1] %vm1003, 0.0
      %1008 = vst.msk [vmem:[#allocation3 + $0x20] sm:$0x1] %vm1003, 0.0
      %1009 = vst.msk [vmem:[#allocation3 + $0x28] sm:$0x1] %vm1003, 0.0
      %1010 = vst.msk [vmem:[#allocation3 + $0x30] sm:$0x1] %vm1003, 0.0
      %1011 = vst.msk [vmem:[#allocation3 + $0x38] sm:$0x1] %vm1003, 0.0
      %1013 = vrot.lane.b32.xlu0 %v898, 24
      %v1014 = vpop.permute.xlu0 %1013
      %1015 = vrot.lane.b32.xlu0 %v899, 24
      %v1016 = vpop.permute.xlu0 %1015
      %1017 = vrot.lane.b32.xlu0 %v900, 24
      %v1018 = vpop.permute.xlu0 %1017
      %1019 = vrot.lane.b32.xlu0 %v901, 24
      %v1020 = vpop.permute.xlu0 %1019
      %1021 = vrot.lane.b32.xlu0 %v902, 24
      %v1022 = vpop.permute.xlu0 %1021
      %1023 = vrot.lane.b32.xlu0 %v903, 24
      %v1024 = vpop.permute.xlu0 %1023
      %1025 = vrot.lane.b32.xlu0 %v904, 24
      %v1026 = vpop.permute.xlu0 %1025
      %1027 = vrot.lane.b32.xlu0 %v905, 24
      %v1028 = vpop.permute.xlu0 %1027
      %vm1037 = vcmask 260288
      %1038 = vst.msk [vmem:[#allocation3 + $0x1] sm:$0x7f] %vm1037, %v1014
      %1039 = vst.msk [vmem:[#allocation3 + $0x9] sm:$0x7f] %vm1037, %v1016
      %1040 = vst.msk [vmem:[#allocation3 + $0x11] sm:$0x7f] %vm1037, %v1018
      %1041 = vst.msk [vmem:[#allocation3 + $0x19] sm:$0x7f] %vm1037, %v1020
      %1042 = vst.msk [vmem:[#allocation3 + $0x21] sm:$0x7f] %vm1037, %v1022
      %1043 = vst.msk [vmem:[#allocation3 + $0x29] sm:$0x7f] %vm1037, %v1024
      %1044 = vst.msk [vmem:[#allocation3 + $0x31] sm:$0x7f] %vm1037, %v1026
      %1045 = vst.msk [vmem:[#allocation3 + $0x39] sm:$0x7f] %vm1037, %v1028
      %1046 = vrot.lane.b32.xlu0 %v898, 32
      %v1047 = vpop.permute.xlu0 %1046
      %1048 = vrot.lane.b32.xlu0 %v899, 32
      %v1049 = vpop.permute.xlu0 %1048
      %1050 = vrot.lane.b32.xlu0 %v900, 32
      %v1051 = vpop.permute.xlu0 %1050
      %1052 = vrot.lane.b32.xlu0 %v901, 32
      %v1053 = vpop.permute.xlu0 %1052
      %1054 = vrot.lane.b32.xlu0 %v902, 32
      %v1055 = vpop.permute.xlu0 %1054
      %1056 = vrot.lane.b32.xlu0 %v903, 32
      %v1057 = vpop.permute.xlu0 %1056
      %1058 = vrot.lane.b32.xlu0 %v904, 32
      %v1059 = vpop.permute.xlu0 %1058
      %1060 = vrot.lane.b32.xlu0 %v905, 32
      %v1061 = vpop.permute.xlu0 %1060
      %vm1070 = vcmask 326912
      %1071 = vst.msk [vmem:[#allocation3] sm:$0xff] %vm1070, %v1047
      %1072 = vst.msk [vmem:[#allocation3 + $0x8] sm:$0xff] %vm1070, %v1049
      %1073 = vst.msk [vmem:[#allocation3 + $0x10] sm:$0xff] %vm1070, %v1051
      %1074 = vst.msk [vmem:[#allocation3 + $0x18] sm:$0xff] %vm1070, %v1053
      %1075 = vst.msk [vmem:[#allocation3 + $0x20] sm:$0xff] %vm1070, %v1055
      %1076 = vst.msk [vmem:[#allocation3 + $0x28] sm:$0xff] %vm1070, %v1057
      %1077 = vst.msk [vmem:[#allocation3 + $0x30] sm:$0xff] %vm1070, %v1059
      %1078 = vst.msk [vmem:[#allocation3 + $0x38] sm:$0xff] %vm1070, %v1061
      %vm1079 = vcmask 385344
      %1080 = vst.msk [vmem:[#allocation3 + $0x7] sm:$0x1] %vm1079, 0.0
      %1081 = vst.msk [vmem:[#allocation3 + $0xf] sm:$0x1] %vm1079, 0.0
      %1082 = vst.msk [vmem:[#allocation3 + $0x17] sm:$0x1] %vm1079, 0.0
      %1083 = vst.msk [vmem:[#allocation3 + $0x1f] sm:$0x1] %vm1079, 0.0
      %1084 = vst.msk [vmem:[#allocation3 + $0x27] sm:$0x1] %vm1079, 0.0
      %1085 = vst.msk [vmem:[#allocation3 + $0x2f] sm:$0x1] %vm1079, 0.0
      %1086 = vst.msk [vmem:[#allocation3 + $0x37] sm:$0x1] %vm1079, 0.0
      %1087 = vst.msk [vmem:[#allocation3 + $0x3f] sm:$0x1] %vm1079, 0.0
      %1088 = vrot.lane.b32.xlu0 %v898, 40
      %v1089 = vpop.permute.xlu0 %1088
      %1090 = vrot.lane.b32.xlu0 %v899, 40
      %v1091 = vpop.permute.xlu0 %1090
      %1092 = vrot.lane.b32.xlu0 %v900, 40
      %v1093 = vpop.permute.xlu0 %1092
      %1094 = vrot.lane.b32.xlu0 %v901, 40
      %v1095 = vpop.permute.xlu0 %1094
      %1096 = vrot.lane.b32.xlu0 %v902, 40
      %v1097 = vpop.permute.xlu0 %1096
      %1098 = vrot.lane.b32.xlu0 %v903, 40
      %v1099 = vpop.permute.xlu0 %1098
      %1100 = vrot.lane.b32.xlu0 %v904, 40
      %v1101 = vpop.permute.xlu0 %1100
      %1102 = vrot.lane.b32.xlu0 %v905, 40
      %v1103 = vpop.permute.xlu0 %1102
      %vm1112 = vcmask 392513
      %1113 = vst.msk [vmem:[#allocation3 - $0x1] sm:$0xfe] %vm1112, %v1089
      %1114 = vst.msk [vmem:[#allocation3 + $0x7] sm:$0xfe] %vm1112, %v1091
      %1115 = vst.msk [vmem:[#allocation3 + $0xf] sm:$0xfe] %vm1112, %v1093
      %1116 = vst.msk [vmem:[#allocation3 + $0x17] sm:$0xfe] %vm1112, %v1095
      %1117 = vst.msk [vmem:[#allocation3 + $0x1f] sm:$0xfe] %vm1112, %v1097
      %1118 = vst.msk [vmem:[#allocation3 + $0x27] sm:$0xfe] %vm1112, %v1099
      %1119 = vst.msk [vmem:[#allocation3 + $0x2f] sm:$0xfe] %vm1112, %v1101
      %1120 = vst.msk [vmem:[#allocation3 + $0x37] sm:$0xfe] %vm1112, %v1103
      %s1121 = scalar_lea.vmem [#allocation3], 56
      %vm1122 = vcmask 458112
      %1123 = vst.msk [vmem:[%s1121] sm:$0xff] %vm1122, 0.0
      %vm1124 = vcmask 450944
      %1125 = vst.msk [vmem:[#allocation3] sm:$0x1] %vm1124, 0.0
      %1126 = vst.msk [vmem:[#allocation3 + $0x8] sm:$0x1] %vm1124, 0.0
      %1127 = vst.msk [vmem:[#allocation3 + $0x10] sm:$0x1] %vm1124, 0.0
      %1128 = vst.msk [vmem:[#allocation3 + $0x18] sm:$0x1] %vm1124, 0.0
      %1129 = vst.msk [vmem:[#allocation3 + $0x20] sm:$0x1] %vm1124, 0.0
      %1130 = vst.msk [vmem:[#allocation3 + $0x28] sm:$0x1] %vm1124, 0.0
      %1131 = vst.msk [vmem:[#allocation3 + $0x30] sm:$0x1] %vm1124, 0.0
      %1132 = vst.msk [vmem:[#allocation3 + $0x38] sm:$0x1] %vm1124, 0.0
      %1133 = vrot.lane.b32.xlu0 %v899, 48
      %v1134 = vpop.permute.xlu0 %1133
      %1135 = vrot.lane.b32.xlu0 %v900, 48
      %v1136 = vpop.permute.xlu0 %1135
      %1137 = vrot.lane.b32.xlu0 %v901, 48
      %v1138 = vpop.permute.xlu0 %1137
      %1139 = vrot.lane.b32.xlu0 %v902, 48
      %v1140 = vpop.permute.xlu0 %1139
      %1141 = vrot.lane.b32.xlu0 %v903, 48
      %v1142 = vpop.permute.xlu0 %1141
      %1143 = vrot.lane.b32.xlu0 %v904, 48
      %v1144 = vpop.permute.xlu0 %1143
      %1145 = vrot.lane.b32.xlu0 %v905, 48
      %v1146 = vpop.permute.xlu0 %1145
      %vm1154 = vcmask 457088
      %1155 = vst.msk [vmem:[#allocation3 + $0x1] sm:$0x7f] %vm1154, %v1134
      %1156 = vst.msk [vmem:[#allocation3 + $0x9] sm:$0x7f] %vm1154, %v1136
      %1157 = vst.msk [vmem:[#allocation3 + $0x11] sm:$0x7f] %vm1154, %v1138
      %1158 = vst.msk [vmem:[#allocation3 + $0x19] sm:$0x7f] %vm1154, %v1140
      %1159 = vst.msk [vmem:[#allocation3 + $0x21] sm:$0x7f] %vm1154, %v1142
      %1160 = vst.msk [vmem:[#allocation3 + $0x29] sm:$0x7f] %vm1154, %v1144
      %1161 = vst.msk [vmem:[#allocation3 + $0x31] sm:$0x7f] %vm1154, %v1146
      %vm1162 = vcmask 523712
      %1163 = vst.msk [vmem:[%s1121] sm:$0xff] %vm1162, 0.0
      %1164 = vrot.lane.b32.xlu0 %v899, 56
      %v1165 = vpop.permute.xlu0 %1164
      %1166 = vrot.lane.b32.xlu0 %v900, 56
      %v1167 = vpop.permute.xlu0 %1166
      %1168 = vrot.lane.b32.xlu0 %v901, 56
      %v1169 = vpop.permute.xlu0 %1168
      %1170 = vrot.lane.b32.xlu0 %v902, 56
      %v1171 = vpop.permute.xlu0 %1170
      %1172 = vrot.lane.b32.xlu0 %v903, 56
      %v1173 = vpop.permute.xlu0 %1172
      %1174 = vrot.lane.b32.xlu0 %v904, 56
      %v1175 = vpop.permute.xlu0 %1174
      %1176 = vrot.lane.b32.xlu0 %v905, 56
      %v1177 = vpop.permute.xlu0 %1176
      %1185 = vst.msk [vmem:[#allocation3] sm:$0xff] %vm1162, %v1165
      %1186 = vst.msk [vmem:[#allocation3 + $0x8] sm:$0xff] %vm1162, %v1167
      %1187 = vst.msk [vmem:[#allocation3 + $0x10] sm:$0xff] %vm1162, %v1169
      %1188 = vst.msk [vmem:[#allocation3 + $0x18] sm:$0xff] %vm1162, %v1171
      %1189 = vst.msk [vmem:[#allocation3 + $0x20] sm:$0xff] %vm1162, %v1173
      %1190 = vst.msk [vmem:[#allocation3 + $0x28] sm:$0xff] %vm1162, %v1175
      %1191 = vst.msk [vmem:[#allocation3 + $0x30] sm:$0xff] %vm1162, %v1177
      %vm1192 = vcmask 589312
      %1193 = vst.msk [vmem:[%s1121] sm:$0xff] %vm1192, 0.0
      %vm1194 = vcmask 582144
      %1195 = vst.msk [vmem:[#allocation3 + $0x7] sm:$0x1] %vm1194, 0.0
      %1196 = vst.msk [vmem:[#allocation3 + $0xf] sm:$0x1] %vm1194, 0.0
      %1197 = vst.msk [vmem:[#allocation3 + $0x17] sm:$0x1] %vm1194, 0.0
      %1198 = vst.msk [vmem:[#allocation3 + $0x1f] sm:$0x1] %vm1194, 0.0
      %1199 = vst.msk [vmem:[#allocation3 + $0x27] sm:$0x1] %vm1194, 0.0
      %1200 = vst.msk [vmem:[#allocation3 + $0x2f] sm:$0x1] %vm1194, 0.0
      %1201 = vst.msk [vmem:[#allocation3 + $0x37] sm:$0x1] %vm1194, 0.0
      %1202 = vst.msk [vmem:[#allocation3 + $0x3f] sm:$0x1] %vm1194, 0.0
      %1203 = vrot.lane.b32.xlu0 %v899, 64
      %v1204 = vpop.permute.xlu0 %1203
      %1205 = vrot.lane.b32.xlu0 %v900, 64
      %v1206 = vpop.permute.xlu0 %1205
      %1207 = vrot.lane.b32.xlu0 %v901, 64
      %v1208 = vpop.permute.xlu0 %1207
      %1209 = vrot.lane.b32.xlu0 %v902, 64
      %v1210 = vpop.permute.xlu0 %1209
      %1211 = vrot.lane.b32.xlu0 %v903, 64
      %v1212 = vpop.permute.xlu0 %1211
      %1213 = vrot.lane.b32.xlu0 %v904, 64
      %v1214 = vpop.permute.xlu0 %1213
      %1215 = vrot.lane.b32.xlu0 %v905, 64
      %v1216 = vpop.permute.xlu0 %1215
      %vm1224 = vcmask 589313
      %1225 = vst.msk [vmem:[#allocation3 - $0x1] sm:$0xfe] %vm1224, %v1204
      %1226 = vst.msk [vmem:[#allocation3 + $0x7] sm:$0xfe] %vm1224, %v1206
      %1227 = vst.msk [vmem:[#allocation3 + $0xf] sm:$0xfe] %vm1224, %v1208
      %1228 = vst.msk [vmem:[#allocation3 + $0x17] sm:$0xfe] %vm1224, %v1210
      %1229 = vst.msk [vmem:[#allocation3 + $0x1f] sm:$0xfe] %vm1224, %v1212
      %1230 = vst.msk [vmem:[#allocation3 + $0x27] sm:$0xfe] %vm1224, %v1214
      %1231 = vst.msk [vmem:[#allocation3 + $0x2f] sm:$0xfe] %vm1224, %v1216
      %v1232 = vld [vmem:[#allocation3] sm:$0xff]
      %v1233 = vld [vmem:[#allocation3 + $0x8] sm:$0xff]
      %v1234 = vld [vmem:[#allocation3 + $0x10] sm:$0xff]
      %v1235 = vld [vmem:[#allocation3 + $0x18] sm:$0xff]
      %v1236 = vld [vmem:[#allocation3 + $0x20] sm:$0xff]
      %v1237 = vld [vmem:[#allocation3 + $0x28] sm:$0xff]
      %v1238 = vld [vmem:[#allocation3 + $0x30] sm:$0xff]
      %v1239 = vld [vmem:[#allocation3 + $0x38] sm:$0xff]
      %v1240 = vpack.c.bf16 %v1233, %v1232
      %v1241 = vpack.c.bf16 %v1235, %v1234
      %v1242 = vpack.c.bf16 %v1237, %v1236
      %v1243 = vpack.c.bf16 %v1239, %v1238
      %v1244 = vld [vmem:[%s4] sm:$0xf]
      %v1245 = vld [vmem:[%s4 + $0x4] sm:$0xf]
      %v1246 = vld [vmem:[%s4 + $0x8] sm:$0xf]
      %v1247 = vld [vmem:[%s4 + $0xc] sm:$0xf]
      %v1248 = vld [vmem:[%s4 + $0x10] sm:$0xf]
      %v1249 = vld [vmem:[%s4 + $0x14] sm:$0xf]
      %v1250 = vld [vmem:[%s4 + $0x18] sm:$0xf]
      %v1251 = vld [vmem:[%s4 + $0x1c] sm:$0xf]
      %v1252 = vld [vmem:[%s4 + $0x20] sm:$0xf]
      %v1262 = vunpack.c.l.b16 %v1244
      %v1263 = vunpack.c.l.b16 %v1245
      %v1264 = vunpack.c.l.b16 %v1246
      %v1265 = vunpack.c.l.b16 %v1247
      %v1266 = vunpack.c.l.b16 %v1248
      %v1267 = vunpack.c.l.b16 %v1249
      %v1268 = vunpack.c.l.b16 %v1250
      %v1269 = vunpack.c.l.b16 %v1251
      %v1270 = vunpack.c.l.b16 %v1252
      %v1271 = vpack.c.b16 %v1263, %v1262
      %v1272 = vpack.c.b16 %v1265, %v1264
      %v1273 = vpack.c.b16 %v1267, %v1266
      %v1274 = vpack.c.b16 %v1269, %v1268
      %v1275 = vpack.c.b16 %v1270, %v1270
      %vm1280 = vcmask 588800
      %v1282 = vsel %vm1280, %v1240, 0
      %v1285 = vsel %vm1280, %v1241, 0
      %v1288 = vsel %vm1280, %v1242, 0
      %v1291 = vsel %vm1280, %v1243, 0
      %vm1293 = vcmask 1043456
      %v1295 = vsel %vm1293, %v1275, 0
      %1297 = vmatprep.subr.bf16.mxu0 0
      %1298 = vmatpush1.bf16.msra.mxu0 0
      %1299 = vmatprep.subr.bf16.mxu0 0
      %1300 = vmatpush1.bf16.msra.mxu0 0
      %1301 = vmatprep.subr.bf16.mxu0 0
      %1302 = vmatpush1.bf16.msra.mxu0 0
      %1303 = vmatprep.subr.bf16.mxu0 0
      %1304 = vmatpush1.bf16.msra.mxu0 %v1295
      %1305 = vmatprep.subr.bf16.mxu0 0
      %1306 = vmatpush1.bf16.msra.mxu0 %v1274
      %1307 = vmatprep.subr.bf16.mxu0 0
      %1308 = vmatpush1.bf16.msra.mxu0 %v1273
      %1309 = vmatprep.subr.bf16.mxu0 0
      %1310 = vmatpush1.bf16.msra.mxu0 %v1272
      %1311 = vmatprep.subr.bf16.mxu0 0
      %1312 = vmatpush1.bf16.msra.mxu0 %v1271
      %1313 = vmatprep.subr.bf16.mxu0 0
      %1314 = vmatpush2.bf16.msra.mxu0 0
      %1315 = vmatprep.subr.bf16.mxu0 0
      %1316 = vmatpush2.bf16.msra.mxu0 0
      %1317 = vmatprep.subr.bf16.mxu0 0
      %1318 = vmatpush2.bf16.msra.mxu0 0
      %1319 = vmatprep.subr.bf16.mxu0 0
      %1320 = vmatpush2.bf16.msra.mxu0 0
      %1321 = vmatprep.subr.bf16.mxu0 0
      %1322 = vmatpush2.bf16.msra.mxu0 0
      %1323 = vmatprep.subr.bf16.mxu0 0
      %1324 = vmatpush2.bf16.msra.mxu0 0
      %1325 = vmatprep.subr.bf16.mxu0 0
      %1326 = vmatpush2.bf16.msra.mxu0 0
      %1327 = vmatprep.subr.bf16.mxu0 0
      %1328 = vmatpush2.bf16.msra.mxu0 0
      %1329 = vmatprep.mubr.bf16.mxu0 0
      %1330 = vmatmul.mubr.bf16.gmra.mxu0 %v1282
      %v1331 = vpop.f32.mrf.mxu0
      %v1332 = vadd.f32 0.0, %v1331
      %v1333 = vpop.f32.mrf.mxu0
      %v1334 = vpop.f32.mrf.mxu0
      %v1335 = vadd.f32 0.0, %v1334
      %v1336 = vpop.f32.mrf.mxu0
      %1337 = vmatprep.mubr.bf16.mxu0 0
      %1338 = vmatmul.mubr.bf16.gmra.mxu0 %v1285
      %v1339 = vpop.f32.mrf.mxu0
      %v1340 = vadd.f32 0.0, %v1339
      %v1341 = vpop.f32.mrf.mxu0
      %v1342 = vpop.f32.mrf.mxu0
      %v1343 = vadd.f32 0.0, %v1342
      %v1344 = vpop.f32.mrf.mxu0
      %1345 = vmatprep.mubr.bf16.mxu0 0
      %1346 = vmatmul.mubr.bf16.gmra.mxu0 %v1288
      %v1347 = vpop.f32.mrf.mxu0
      %v1348 = vadd.f32 0.0, %v1347
      %v1349 = vpop.f32.mrf.mxu0
      %v1350 = vpop.f32.mrf.mxu0
      %v1351 = vadd.f32 0.0, %v1350
      %v1352 = vpop.f32.mrf.mxu0
      %1353 = vmatprep.mubr.bf16.mxu0 0
      %1354 = vmatmul.mubr.bf16.gmra.mxu0 %v1291
      %v1355 = vpop.f32.mrf.mxu0
      %v1356 = vadd.f32 0.0, %v1355
      %v1357 = vpop.f32.mrf.mxu0
      %v1358 = vpop.f32.mrf.mxu0
      %v1359 = vadd.f32 0.0, %v1358
      %v1360 = vpop.f32.mrf.mxu0
      %1361 = vdwg.mxu0
      %v1362 = vld [vmem:[%s5] sm:$0x1]
      %v1364 = vlaneseq
      %v1365 = vshrl.u32 %v1364, 7
      %v1366 = vsub.s32 0, %v1365
      %v1367 = vrot.slane %v1362, %v1366
      %v1369 = vmul.f32 %v1332, %v1367
      %v1370 = vmul.f32 %v1335, %v1367
      %v1371 = vmul.f32 %v1340, %v1367
      %v1372 = vmul.f32 %v1343, %v1367
      %v1373 = vmul.f32 %v1348, %v1367
      %v1374 = vmul.f32 %v1351, %v1367
      %v1375 = vmul.f32 %v1356, %v1367
      %v1376 = vmul.f32 %v1359, %v1367
      %v1377 = vld [vmem:[%s6] sm:$0x1]
      %v1379 = vlaneseq
      %v1380 = vshrl.u32 %v1379, 7
      %v1381 = vsub.s32 0, %v1380
      %v1382 = vrot.slane %v1377, %v1381
      %v1384 = vadd.f32 %v1369, %v1382
      %v1385 = vadd.f32 %v1370, %v1382
      %v1386 = vadd.f32 %v1371, %v1382
      %v1387 = vadd.f32 %v1372, %v1382
      %v1388 = vadd.f32 %v1373, %v1382
      %v1389 = vadd.f32 %v1374, %v1382
      %v1390 = vadd.f32 %v1375, %v1382
      %v1391 = vadd.f32 %v1376, %v1382
      %v1392 = vmul.f32 %v1384, 0.5
      %v1393 = vmul.f32 %v1385, 0.5
      %v1394 = vmul.f32 %v1386, 0.5
      %v1395 = vmul.f32 %v1387, 0.5
      %v1396 = vmul.f32 %v1388, 0.5
      %v1397 = vmul.f32 %v1389, 0.5
      %v1398 = vmul.f32 %v1390, 0.5
      %v1399 = vmul.f32 %v1391, 0.5
      %v1400 = vmul.f32 %v1384, 0.70710677
      %v1401 = vmul.f32 %v1385, 0.70710677
      %v1402 = vmul.f32 %v1386, 0.70710677
      %v1403 = vmul.f32 %v1387, 0.70710677
      %v1404 = vmul.f32 %v1388, 0.70710677
      %v1405 = vmul.f32 %v1389, 0.70710677
      %v1406 = vmul.f32 %v1390, 0.70710677
      %v1407 = vmul.f32 %v1391, 0.70710677
      %v1408 = verf.f32.pop %v1400
      %v1409 = verf.f32.pop %v1401
      %v1410 = verf.f32.pop %v1402
      %v1411 = verf.f32.pop %v1403
      %v1412 = verf.f32.pop %v1404
      %v1413 = verf.f32.pop %v1405
      %v1414 = verf.f32.pop %v1406
      %v1415 = verf.f32.pop %v1407
      %v1416 = vadd.f32 %v1408, 1.0
      %v1417 = vadd.f32 %v1409, 1.0
      %v1418 = vadd.f32 %v1410, 1.0
      %v1419 = vadd.f32 %v1411, 1.0
      %v1420 = vadd.f32 %v1412, 1.0
      %v1421 = vadd.f32 %v1413, 1.0
      %v1422 = vadd.f32 %v1414, 1.0
      %v1423 = vadd.f32 %v1415, 1.0
      %v1424 = vmul.f32 %v1392, %v1416
      %v1425 = vmul.f32 %v1393, %v1417
      %v1426 = vmul.f32 %v1394, %v1418
      %v1427 = vmul.f32 %v1395, %v1419
      %v1428 = vmul.f32 %v1396, %v1420
      %v1429 = vmul.f32 %v1397, %v1421
      %v1430 = vmul.f32 %v1398, %v1422
      %v1431 = vmul.f32 %v1399, %v1423
      %1432 = vxpose.xlu0.b32.start [1/16] %v1424, 128
      %1433 = vxpose.xlu0.b32.cont [2/16] %v1425, 128
      %1434 = vxpose.xlu0.b32.cont [3/16] %v1426, 128
      %1435 = vxpose.xlu0.b32.cont [4/16] %v1427, 128
      %1436 = vxpose.xlu0.b32.cont [5/16] %v1428, 128
      %1437 = vxpose.xlu0.b32.cont [6/16] %v1429, 128
      %1438 = vxpose.xlu0.b32.cont [7/16] %v1430, 128
      %1439 = vxpose.xlu0.b32.cont [8/16] %v1431, 128
      %1440 = vxpose.xlu0.b32.cont [9/16] 0.0, 128
      %1441 = vxpose.xlu0.b32.cont [10/16] 0.0, 128
      %1442 = vxpose.xlu0.b32.cont [11/16] 0.0, 128
      %1443 = vxpose.xlu0.b32.cont [12/16] 0.0, 128
      %1444 = vxpose.xlu0.b32.cont [13/16] 0.0, 128
      %1445 = vxpose.xlu0.b32.cont [14/16] 0.0, 128
      %1446 = vxpose.xlu0.b32.cont [15/16] 0.0, 128
      %1447 = vxpose.xlu0.b32.end [16/16] 0.0, 128
      %v1448 = vpop.trf.xlu0
      %v1449 = vpop.trf.xlu0
      %v1450 = vpop.trf.xlu0
      %v1451 = vpop.trf.xlu0
      %v1452 = vpop.trf.xlu0
      %v1453 = vpop.trf.xlu0
      %v1454 = vpop.trf.xlu0
      %v1455 = vpop.trf.xlu0
      %v1456 = vpop.trf.xlu0
      %v1457 = vpop.trf.xlu0
      %v1458 = vpop.trf.xlu0
      %v1459 = vpop.trf.xlu0
      %v1460 = vpop.trf.xlu0
      %v1461 = vpop.trf.xlu0
      %v1462 = vpop.trf.xlu0
      %v1463 = vpop.trf.xlu0
      %vm1464 = vcmask 523264
      %1465 = vst.msk [vmem:[%s276] sm:$0xff] %vm1464, %v1448
      %p1466 = scmp.lt.s32.totalorder %s18, 1
      %s1467 = scalar_select %p1466, %s18, 1
      %s1468 = smul.addr %s1467, 8
      %s1469 = scalar_lea.vmem %s7, %s1468
      // Predicated region
      $region49: #{down_pallas.1} parent=47 // pred_check
        %p1470 = pneg %p188
      $region50: #{down_pallas.1} parent=47 // pred_check_branch
        %1472 = sbr.rel (%p1470) target = $region52
      $region51: #{down_pallas.1} parent=47 // pred_region
        _
      $region52: #{down_pallas.1} parent=47 // pred_fallthru
        _
    $region48: #{down_pallas.1} parent=5 // pred_fallthru
      _
    %p1473 = scmp.le.s32.totalorder 2, %s13
    // Predicated region
    $region53: #{down_pallas.1} parent=5 // pred_check
      %p1474 = pneg %p1473
    $region54: #{down_pallas.1} parent=5 // pred_check_branch
      %1476 = sbr.rel (%p1474) target = $region56
    $region55: #{down_pallas.1} parent=5 // pred_region
      %s1477 = ssub.s32 %s13, 2
      // Predicated region
      $region57: #{down_pallas.1} parent=55 // pred_check
        %p1478 = pneg %p194
      $region58: #{down_pallas.1} parent=55 // pred_check_branch
        %1480 = sbr.rel (%p1478) target = $region60
      $region59: #{down_pallas.1} parent=55 // pred_region
        %p1481 = scmp.lt.s32.totalorder %s19, 1
        %s1482 = scalar_select %p1481, %s19, 1
        %s1483 = smul.addr %s1482, 8
        %s1484 = scalar_lea.vmem %s7, %s1483
      $region60: #{down_pallas.1} parent=55 // pred_fallthru
        _
    $region56: #{down_pallas.1} parent=5 // pred_fallthru
      _
  $region6: #{down_pallas.1} parent=0 // loop_footer
    %s17 = sadd.s32 1, %s13
  $region7: #{down_pallas.1} parent=0 // loop_footer_branch
    %12 = sbr.rel target = $region3
  $region8: #{down_pallas.1} parent=0 // loop_exit
    _

</llo_original>
